<compile_context>
chip_gen: v6e
topology: v6e:2x2x1
jax: 0.10.0
libtpu: 0.0.40
codegen_flags: <defaults>
</compile_context>

<pallas_src>
import functools

import jax
import jax.numpy as jnp
from jax.experimental import pallas as pl
from jax.experimental.pallas import tpu as pltpu


# ------------------------------ spec helpers -------------------------------- #

def _const_spec(shape):
    """BlockSpec for an operand whose block never changes across grid steps.

    Single-buffered (pl.Buffered(1)): the default double buffer would just
    duplicate the GSO / weights in VMEM.  Falls back to the default pipeline
    mode if this JAX build's BlockSpec has no `pipeline_mode` kwarg.
    """
    index_map = lambda i, _nd=len(shape): (0,) * _nd
    try:
        return pl.BlockSpec(shape, index_map, pipeline_mode=pl.Buffered(1))
    except (TypeError, AttributeError):
        return pl.BlockSpec(shape, index_map)


# ------------------------------ fused kernel -------------------------------- #

def _selection_gnn_kernel(x_ref, s_ref, *refs, n_gfl, n_mlp, bc):
    """One batch chunk (bc samples) per grid step; full GFL + MLP forward pass.

    refs = [Hkron_0, b_0, ..., Hkron_{L-1}, b_{L-1},
            W1r, bm_0, W_1, bm_1, ..., out_ref]

    Activation layout: 2-D (F*bc, N), row index = f*bc + b (feature-major,
    batch-inner), nodes on the lane axis.
    """
    out_ref = refs[-1]                       # (1, bc, D_out) output block
    params = refs[:-1]
    gfl_refs = params[:2 * n_gfl]
    mlp_refs = params[2 * n_gfl:]

    s = s_ref[...]                           # (N, N) f32 GSO; shift = z @ S
    z = x_ref[0]                             # (F0*bc, N)

    # --- Graph filtering layers (LSIGF, E = 1) + ReLU ------------------------ #
    # taps: one whole-chunk (F*bc, N) @ (N, N) dot per tap (shift chain in f32);
    # contraction: one (Fout*bc, Fin*bc) @ (Fin*bc, N) dot per tap, accumulated
    # in f32 (no tap concatenation -> no lane-shift relayouts).
    for l in range(n_gfl):
        h_ref = gfl_refs[2 * l]              # (K, Fout*bc, Fin*bc)
        bias = gfl_refs[2 * l + 1][...]      # (Fout*bc, 1) f32
        k_taps = h_ref.shape[0]

        w0 = h_ref[0]
        acc = jnp.dot(w0, z.astype(w0.dtype), preferred_element_type=jnp.float32)
        t = z
        for k in range(1, k_taps):
            t = jnp.dot(t, s, preferred_element_type=jnp.float32)  # S^k, f32
            wk = h_ref[k]
            acc = acc + jnp.dot(wk, t.astype(wk.dtype),
                                preferred_element_type=jnp.float32)
        z = jnp.maximum(acc + bias, 0.0)     # (Fout*bc, N)

    # --- MLP ------------------------------------------------------------------ #
    # First layer == flatten(F_last, N) @ W1 per sample; with the feature-major
    # layout this is exactly sum_f  z[f-block] @ W1[f*N:(f+1)*N, :], i.e. F_last
    # accumulating lane-dense (bc, N) @ (N, D1) dots.  No flatten, no scratch.
    w1_ref = mlp_refs[0]                     # (F_last, N, D1)
    b1 = mlp_refs[1][...]                    # (1, D1) f32
    f_last = w1_ref.shape[0]
    d1 = w1_ref.shape[2]
    y = jnp.zeros((bc, d1), jnp.float32)
    for f in range(f_last):
        zf = z[f * bc:(f + 1) * bc, :]       # (bc, N) static slice
        wf = w1_ref[f]                       # (N, D1)
        y = y + jnp.dot(zf.astype(wf.dtype), wf,
                        preferred_element_type=jnp.float32)
    y = y + b1
    if n_mlp > 1:
        y = jnp.maximum(y, 0.0)

    # Remaining layers: batched over the chunk, (bc, D) @ (D, D').
    for m in range(1, n_mlp):
        w = mlp_refs[2 * m][...]
        bm = mlp_refs[2 * m + 1][...]
        y = jnp.dot(y.astype(w.dtype), w, preferred_element_type=jnp.float32) + bm
        if m < n_mlp - 1:
            y = jnp.maximum(y, 0.0)

    out_ref[0] = y                           # (bc, D_out), one store per chunk


# ------------------------------ model wrapper ------------------------------- #

@functools.partial(jax.jit, static_argnames=("compute_dtype", "num_chunks"))
def selection_gnn_forward(x, S, gfl_params, mlp_params, *,
                          compute_dtype=jnp.float32, num_chunks=None):
    """x: (B, F0, N) -> (B, dimLayersMLP[-1]). Mirrors SelectionGNN.forward."""
    B, F0, N = x.shape
    n_gfl = len(gfl_params)
    n_mlp = len(mlp_params)
    assert n_mlp >= 1
    F_last = gfl_params[-1][0].shape[1]
    D_out = mlp_params[-1][0].shape[1]

    # >= 2 parallel chunks so both v7x TensorCores get work; each chunk still
    # batches bc samples into every matmul.
    if num_chunks is None:
        num_chunks = 2 if (B % 2 == 0 and B >= 2) else 1
    assert B % num_chunks == 0
    bc = B // num_chunks

    # Host-side (free) re-layout: chunk c, row f*bc + b = x[c*bc + b, f, :].
    x_c = (x.astype(jnp.float32)
           .reshape(num_chunks, bc, F0, N)
           .transpose(0, 2, 1, 3)
           .reshape(num_chunks, F0 * bc, N))

    eye_bc = jnp.eye(bc, dtype=jnp.float32)
    flat_params = []
    for (H, b) in gfl_params:                # H: (K, Fout, Fin), b: (Fout, 1)
        K, Fout, Fin = H.shape
        # Kron-expand (H_k x I_bc) so the whole chunk's tap contraction is one dot.
        Hk = jnp.einsum('kgf,ij->kgifj', H.astype(jnp.float32), eye_bc)
        Hk = Hk.reshape(K, Fout * bc, Fin * bc).astype(compute_dtype)
        flat_params.append(Hk)
        flat_params.append(jnp.repeat(b.astype(jnp.float32).reshape(Fout, 1),
                                      bc, axis=0))          # (Fout*bc, 1)
    for i, (W, bm) in enumerate(mlp_params):  # W: (Din, Dout), bm: (1, Dout)
        W = W.astype(compute_dtype)
        if i == 0:
            # torch flatten index f*N + n  ->  view W1 as (F_last, N, D1)
            W = W.reshape(F_last, N, W.shape[1])
        flat_params.append(W)
        flat_params.append(bm.astype(jnp.float32).reshape(1, -1))

    kernel = functools.partial(_selection_gnn_kernel,
                               n_gfl=n_gfl, n_mlp=n_mlp, bc=bc)

    in_specs = [
        pl.BlockSpec((1, F0 * bc, N), lambda i: (i, 0, 0)),   # per-chunk signal
        _const_spec((N, N)),                                  # GSO (single-buffered)
    ]
    for p in flat_params:                                     # weights / biases
        in_specs.append(_const_spec(p.shape))

    out = pl.pallas_call(
        kernel,
        out_shape=jax.ShapeDtypeStruct((num_chunks, bc, D_out), jnp.float32),
        grid=(num_chunks,),
        in_specs=in_specs,
        out_specs=pl.BlockSpec((1, bc, D_out), lambda i: (i, 0, 0)),
        compiler_params=pltpu.CompilerParams(dimension_semantics=("parallel",)),
    )(x_c, S.astype(jnp.float32), *flat_params)
    return out.reshape(B, D_out)


def reference_forward(x, S, gfl_params, mlp_params):
    """Pure-JAX reference of the same forward pass (highest precision)."""
    y = x.astype(jnp.float32)
    for (H, b) in gfl_params:
        K = H.shape[0]
        z = y
        acc = jnp.einsum('gf,bfn->bgn', H[0], z, precision='highest')
        for k in range(1, K):
            z = jnp.einsum('bfm,mn->bfn', z, S, precision='highest')
            acc = acc + jnp.einsum('gf,bfn->bgn', H[k], z, precision='highest')
        acc = acc + b[None]                  # (1, Fout, 1)
        y = jnp.maximum(acc, 0.0)
    y = y.reshape(y.shape[0], -1)            # torch: (B, F_last * N), f*N + n
    for i, (W, bm) in enumerate(mlp_params):
        y = jnp.dot(y, W, precision='highest') + bm
        if i < len(mlp_params) - 1:
            y = jnp.maximum(y, 0.0)
    return y


# ---------------------------------- main ------------------------------------ #

if __name__ == "__main__":
    key = jax.random.PRNGKey(0)

    # Architecture hyperparameters (small, consistent with the module's __init__):
    B = 4
    N = 16
    dimNodeSignals = [4, 8, 16]      # F: L+1 entries
    nFilterTaps = [3, 3]             # K: L entries
    dimLayersMLP = [32, 8]
    L = len(nFilterTaps)

    keys = jax.random.split(key, 16)
    kidx = 0

    # GSO: symmetric, normalized so repeated shifts stay bounded.
    A = jax.random.normal(keys[kidx], (N, N), dtype=jnp.float32); kidx += 1
    S = 0.5 * (A + A.T)
    S = S / jnp.max(jnp.sum(jnp.abs(S), axis=1))

    # Graph-filter parameters: H_l of shape (K_l, F_{l+1}, F_l), bias (F_{l+1}, 1)
    gfl_params = []
    for l in range(L):
        Fin, Fout, K = dimNodeSignals[l], dimNodeSignals[l + 1], nFilterTaps[l]
        stdv = 1.0 / jnp.sqrt(jnp.float32(Fin * K))
        H = stdv * jax.random.normal(keys[kidx], (K, Fout, Fin), dtype=jnp.float32); kidx += 1
        bvec = stdv * jax.random.normal(keys[kidx], (Fout, 1), dtype=jnp.float32); kidx += 1
        gfl_params.append((H, bvec))

    # MLP parameters: first layer takes N * F[-1] features.
    mlp_params = []
    dims = [N * dimNodeSignals[-1]] + list(dimLayersMLP)
    for l in range(len(dimLayersMLP)):
        Din, Dout = dims[l], dims[l + 1]
        stdv = 1.0 / jnp.sqrt(jnp.float32(Din))
        W = stdv * jax.random.normal(keys[kidx], (Din, Dout), dtype=jnp.float32); kidx += 1
        bvec = stdv * jax.random.normal(keys[kidx], (1, Dout), dtype=jnp.float32); kidx += 1
        mlp_params.append((W, bvec))

    # Input: batchSize x dimFeatures x numberNodes
    x = jax.random.normal(keys[kidx], (B, dimNodeSignals[0], N), dtype=jnp.float32)

    ref = reference_forward(x, S, gfl_params, mlp_params)

    # All-f32 path: tight tolerance (f32 shift chain, f32 accumulation).
    out_f32 = jax.block_until_ready(
        selection_gnn_forward(x, S, gfl_params, mlp_params))
    assert out_f32.shape == (B, dimLayersMLP[-1])
    err32 = jnp.max(jnp.abs(out_f32 - ref))
    assert jnp.allclose(out_f32, ref, rtol=1e-4, atol=1e-5), (
        f"f32 max abs diff {err32}")

    # bf16-MXU-operand path (v6e/v7x): filter/MLP contraction operands in bf16,
    # shift chain + accumulation kept in f32.
    out_bf16 = jax.block_until_ready(
        selection_gnn_forward(x, S, gfl_params, mlp_params,
                              compute_dtype=jnp.bfloat16))
    err16 = jnp.max(jnp.abs(out_bf16 - ref))
    assert jnp.allclose(out_bf16, ref, rtol=5e-2, atol=5e-2), (
        f"bf16 max abs diff {err16}")

    print("KERNEL_OK")
</pallas_src>

<mosaic_0001>
module attributes {stable_mosaic.version = 11 : i64} {
  func.func @_selection_gnn_kernel(%arg0: i32, %arg1: memref<1x8x16xf32, #tpu.memory_space<vmem>>, %arg2: memref<16x16xf32, #tpu.memory_space<vmem>>, %arg3: memref<3x16x8xf32, #tpu.memory_space<vmem>>, %arg4: memref<16x1xf32, #tpu.memory_space<vmem>>, %arg5: memref<3x32x16xf32, #tpu.memory_space<vmem>>, %arg6: memref<32x1xf32, #tpu.memory_space<vmem>>, %arg7: memref<16x16x32xf32, #tpu.memory_space<vmem>>, %arg8: memref<1x32xf32, #tpu.memory_space<vmem>>, %arg9: memref<32x8xf32, #tpu.memory_space<vmem>>, %arg10: memref<1x8xf32, #tpu.memory_space<vmem>>, %arg11: memref<1x2x8xf32, #tpu.memory_space<vmem>>) attributes {dimension_semantics = [#tpu.dimension_semantics<parallel>], iteration_bounds = array<i64: 2>, scalar_prefetch = 0 : i64, scratch_operands = 0 : i64, tpu.core_type = #tpu.core_type<tc>, window_params = [{transform_indices = @transform_0, window_bounds = array<i64: 1, 8, 16>}, {pipeline_mode = #tpu.pipeline_mode<synchronous>, transform_indices = @transform_1, window_bounds = array<i64: 16, 16>}, {pipeline_mode = #tpu.pipeline_mode<synchronous>, transform_indices = @transform_2, window_bounds = array<i64: 3, 16, 8>}, {pipeline_mode = #tpu.pipeline_mode<synchronous>, transform_indices = @transform_3, window_bounds = array<i64: 16, 1>}, {pipeline_mode = #tpu.pipeline_mode<synchronous>, transform_indices = @transform_4, window_bounds = array<i64: 3, 32, 16>}, {pipeline_mode = #tpu.pipeline_mode<synchronous>, transform_indices = @transform_5, window_bounds = array<i64: 32, 1>}, {pipeline_mode = #tpu.pipeline_mode<synchronous>, transform_indices = @transform_6, window_bounds = array<i64: 16, 16, 32>}, {pipeline_mode = #tpu.pipeline_mode<synchronous>, transform_indices = @transform_7, window_bounds = array<i64: 1, 32>}, {pipeline_mode = #tpu.pipeline_mode<synchronous>, transform_indices = @transform_8, window_bounds = array<i64: 32, 8>}, {pipeline_mode = #tpu.pipeline_mode<synchronous>, transform_indices = @transform_9, window_bounds = array<i64: 1, 8>}, {transform_indices = @transform_10, window_bounds = array<i64: 1, 2, 8>}]} {
    %c0 = arith.constant 0 : index
    %c0_0 = arith.constant 0 : index
    %0 = vector.load %arg2[%c0, %c0_0] : memref<16x16xf32, #tpu.memory_space<vmem>>, vector<16x16xf32>
    %c0_1 = arith.constant 0 : index
    %c0_2 = arith.constant 0 : index
    %c0_3 = arith.constant 0 : index
    %1 = vector.load %arg1[%c0_1, %c0_2, %c0_3] : memref<1x8x16xf32, #tpu.memory_space<vmem>>, vector<1x8x16xf32>
    %2 = vector.shape_cast %1 : vector<1x8x16xf32> to vector<8x16xf32>
    %c0_4 = arith.constant 0 : index
    %c0_5 = arith.constant 0 : index
    %3 = vector.load %arg4[%c0_4, %c0_5] : memref<16x1xf32, #tpu.memory_space<vmem>>, vector<16x1xf32>
    %c0_6 = arith.constant 0 : index
    %c0_7 = arith.constant 0 : index
    %c0_8 = arith.constant 0 : index
    %4 = vector.load %arg3[%c0_6, %c0_7, %c0_8] : memref<3x16x8xf32, #tpu.memory_space<vmem>>, vector<1x16x8xf32>
    %5 = vector.shape_cast %4 : vector<1x16x8xf32> to vector<16x8xf32>
    %cst = arith.constant dense<0.000000e+00> : vector<16x16xf32>
    %6 = tpu.matmul %5, %2, %cst {dimension_numbers = #tpu.dot_dimension_numbers<[1], [0], [0], [1], [0, 0, 1, 1], [], []>} : vector<16x8xf32>, vector<8x16xf32>, vector<16x16xf32> -> vector<16x16xf32>
    %cst_9 = arith.constant dense<0.000000e+00> : vector<8x16xf32>
    %7 = tpu.matmul %2, %0, %cst_9 {dimension_numbers = #tpu.dot_dimension_numbers<[1], [0], [0], [1], [0, 0, 1, 1], [], []>} : vector<8x16xf32>, vector<16x16xf32>, vector<8x16xf32> -> vector<8x16xf32>
    %c1 = arith.constant 1 : index
    %c0_10 = arith.constant 0 : index
    %c0_11 = arith.constant 0 : index
    %8 = vector.load %arg3[%c1, %c0_10, %c0_11] : memref<3x16x8xf32, #tpu.memory_space<vmem>>, vector<1x16x8xf32>
    %9 = vector.shape_cast %8 : vector<1x16x8xf32> to vector<16x8xf32>
    %cst_12 = arith.constant dense<0.000000e+00> : vector<16x16xf32>
    %10 = tpu.matmul %9, %7, %cst_12 {dimension_numbers = #tpu.dot_dimension_numbers<[1], [0], [0], [1], [0, 0, 1, 1], [], []>} : vector<16x8xf32>, vector<8x16xf32>, vector<16x16xf32> -> vector<16x16xf32>
    %11 = arith.addf %6, %10 : vector<16x16xf32>
    %cst_13 = arith.constant dense<0.000000e+00> : vector<8x16xf32>
    %12 = tpu.matmul %7, %0, %cst_13 {dimension_numbers = #tpu.dot_dimension_numbers<[1], [0], [0], [1], [0, 0, 1, 1], [], []>} : vector<8x16xf32>, vector<16x16xf32>, vector<8x16xf32> -> vector<8x16xf32>
    %c2 = arith.constant 2 : index
    %c0_14 = arith.constant 0 : index
    %c0_15 = arith.constant 0 : index
    %13 = vector.load %arg3[%c2, %c0_14, %c0_15] : memref<3x16x8xf32, #tpu.memory_space<vmem>>, vector<1x16x8xf32>
    %14 = vector.shape_cast %13 : vector<1x16x8xf32> to vector<16x8xf32>
    %cst_16 = arith.constant dense<0.000000e+00> : vector<16x16xf32>
    %15 = tpu.matmul %14, %12, %cst_16 {dimension_numbers = #tpu.dot_dimension_numbers<[1], [0], [0], [1], [0, 0, 1, 1], [], []>} : vector<16x8xf32>, vector<8x16xf32>, vector<16x16xf32> -> vector<16x16xf32>
    %16 = arith.addf %11, %15 : vector<16x16xf32>
    %17 = vector.broadcast %3 : vector<16x1xf32> to vector<16x16xf32>
    %18 = arith.addf %16, %17 : vector<16x16xf32>
    %cst_17 = arith.constant 0.000000e+00 : f32
    %19 = vector.broadcast %cst_17 : f32 to vector<16x16xf32>
    %20 = arith.maximumf %18, %19 : vector<16x16xf32>
    %c0_18 = arith.constant 0 : index
    %c0_19 = arith.constant 0 : index
    %21 = vector.load %arg6[%c0_18, %c0_19] : memref<32x1xf32, #tpu.memory_space<vmem>>, vector<32x1xf32>
    %c0_20 = arith.constant 0 : index
    %c0_21 = arith.constant 0 : index
    %c0_22 = arith.constant 0 : index
    %22 = vector.load %arg5[%c0_20, %c0_21, %c0_22] : memref<3x32x16xf32, #tpu.memory_space<vmem>>, vector<1x32x16xf32>
    %23 = vector.shape_cast %22 : vector<1x32x16xf32> to vector<32x16xf32>
    %cst_23 = arith.constant dense<0.000000e+00> : vector<32x16xf32>
    %24 = tpu.matmul %23, %20, %cst_23 {dimension_numbers = #tpu.dot_dimension_numbers<[1], [0], [0], [1], [0, 0, 1, 1], [], []>} : vector<32x16xf32>, vector<16x16xf32>, vector<32x16xf32> -> vector<32x16xf32>
    %cst_24 = arith.constant dense<0.000000e+00> : vector<16x16xf32>
    %25 = tpu.matmul %20, %0, %cst_24 {dimension_numbers = #tpu.dot_dimension_numbers<[1], [0], [0], [1], [0, 0, 1, 1], [], []>} : vector<16x16xf32>, vector<16x16xf32>, vector<16x16xf32> -> vector<16x16xf32>
    %c1_25 = arith.constant 1 : index
    %c0_26 = arith.constant 0 : index
    %c0_27 = arith.constant 0 : index
    %26 = vector.load %arg5[%c1_25, %c0_26, %c0_27] : memref<3x32x16xf32, #tpu.memory_space<vmem>>, vector<1x32x16xf32>
    %27 = vector.shape_cast %26 : vector<1x32x16xf32> to vector<32x16xf32>
    %cst_28 = arith.constant dense<0.000000e+00> : vector<32x16xf32>
    %28 = tpu.matmul %27, %25, %cst_28 {dimension_numbers = #tpu.dot_dimension_numbers<[1], [0], [0], [1], [0, 0, 1, 1], [], []>} : vector<32x16xf32>, vector<16x16xf32>, vector<32x16xf32> -> vector<32x16xf32>
    %29 = arith.addf %24, %28 : vector<32x16xf32>
    %cst_29 = arith.constant dense<0.000000e+00> : vector<16x16xf32>
    %30 = tpu.matmul %25, %0, %cst_29 {dimension_numbers = #tpu.dot_dimension_numbers<[1], [0], [0], [1], [0, 0, 1, 1], [], []>} : vector<16x16xf32>, vector<16x16xf32>, vector<16x16xf32> -> vector<16x16xf32>
    %c2_30 = arith.constant 2 : index
    %c0_31 = arith.constant 0 : index
    %c0_32 = arith.constant 0 : index
    %31 = vector.load %arg5[%c2_30, %c0_31, %c0_32] : memref<3x32x16xf32, #tpu.memory_space<vmem>>, vector<1x32x16xf32>
    %32 = vector.shape_cast %31 : vector<1x32x16xf32> to vector<32x16xf32>
    %cst_33 = arith.constant dense<0.000000e+00> : vector<32x16xf32>
    %33 = tpu.matmul %32, %30, %cst_33 {dimension_numbers = #tpu.dot_dimension_numbers<[1], [0], [0], [1], [0, 0, 1, 1], [], []>} : vector<32x16xf32>, vector<16x16xf32>, vector<32x16xf32> -> vector<32x16xf32>
    %34 = arith.addf %29, %33 : vector<32x16xf32>
    %35 = vector.broadcast %21 : vector<32x1xf32> to vector<32x16xf32>
    %36 = arith.addf %34, %35 : vector<32x16xf32>
    %cst_34 = arith.constant 0.000000e+00 : f32
    %37 = vector.broadcast %cst_34 : f32 to vector<32x16xf32>
    %38 = arith.maximumf %36, %37 : vector<32x16xf32>
    %c0_35 = arith.constant 0 : index
    %c0_36 = arith.constant 0 : index
    %39 = vector.load %arg8[%c0_35, %c0_36] : memref<1x32xf32, #tpu.memory_space<vmem>>, vector<1x32xf32>
    %cst_37 = arith.constant 0.000000e+00 : f32
    %40 = vector.broadcast %cst_37 : f32 to vector<2x32xf32>
    %41 = vector.extract_strided_slice %38 {offsets = [0, 0], sizes = [2, 16], strides = [1, 1]} : vector<32x16xf32> to vector<2x16xf32>
    %c0_38 = arith.constant 0 : index
    %c0_39 = arith.constant 0 : index
    %c0_40 = arith.constant 0 : index
    %42 = vector.load %arg7[%c0_38, %c0_39, %c0_40] : memref<16x16x32xf32, #tpu.memory_space<vmem>>, vector<1x16x32xf32>
    %43 = vector.shape_cast %42 : vector<1x16x32xf32> to vector<16x32xf32>
    %cst_41 = arith.constant dense<0.000000e+00> : vector<2x32xf32>
    %44 = tpu.matmul %41, %43, %cst_41 {dimension_numbers = #tpu.dot_dimension_numbers<[1], [0], [0], [1], [0, 0, 1, 1], [], []>} : vector<2x16xf32>, vector<16x32xf32>, vector<2x32xf32> -> vector<2x32xf32>
    %45 = arith.addf %40, %44 : vector<2x32xf32>
    %46 = vector.extract_strided_slice %38 {offsets = [2, 0], sizes = [2, 16], strides = [1, 1]} : vector<32x16xf32> to vector<2x16xf32>
    %c1_42 = arith.constant 1 : index
    %c0_43 = arith.constant 0 : index
    %c0_44 = arith.constant 0 : index
    %47 = vector.load %arg7[%c1_42, %c0_43, %c0_44] : memref<16x16x32xf32, #tpu.memory_space<vmem>>, vector<1x16x32xf32>
    %48 = vector.shape_cast %47 : vector<1x16x32xf32> to vector<16x32xf32>
    %cst_45 = arith.constant dense<0.000000e+00> : vector<2x32xf32>
    %49 = tpu.matmul %46, %48, %cst_45 {dimension_numbers = #tpu.dot_dimension_numbers<[1], [0], [0], [1], [0, 0, 1, 1], [], []>} : vector<2x16xf32>, vector<16x32xf32>, vector<2x32xf32> -> vector<2x32xf32>
    %50 = arith.addf %45, %49 : vector<2x32xf32>
    %51 = vector.extract_strided_slice %38 {offsets = [4, 0], sizes = [2, 16], strides = [1, 1]} : vector<32x16xf32> to vector<2x16xf32>
    %c2_46 = arith.constant 2 : index
    %c0_47 = arith.constant 0 : index
    %c0_48 = arith.constant 0 : index
    %52 = vector.load %arg7[%c2_46, %c0_47, %c0_48] : memref<16x16x32xf32, #tpu.memory_space<vmem>>, vector<1x16x32xf32>
    %53 = vector.shape_cast %52 : vector<1x16x32xf32> to vector<16x32xf32>
    %cst_49 = arith.constant dense<0.000000e+00> : vector<2x32xf32>
    %54 = tpu.matmul %51, %53, %cst_49 {dimension_numbers = #tpu.dot_dimension_numbers<[1], [0], [0], [1], [0, 0, 1, 1], [], []>} : vector<2x16xf32>, vector<16x32xf32>, vector<2x32xf32> -> vector<2x32xf32>
    %55 = arith.addf %50, %54 : vector<2x32xf32>
    %56 = vector.extract_strided_slice %38 {offsets = [6, 0], sizes = [2, 16], strides = [1, 1]} : vector<32x16xf32> to vector<2x16xf32>
    %c3 = arith.constant 3 : index
    %c0_50 = arith.constant 0 : index
    %c0_51 = arith.constant 0 : index
    %57 = vector.load %arg7[%c3, %c0_50, %c0_51] : memref<16x16x32xf32, #tpu.memory_space<vmem>>, vector<1x16x32xf32>
    %58 = vector.shape_cast %57 : vector<1x16x32xf32> to vector<16x32xf32>
    %cst_52 = arith.constant dense<0.000000e+00> : vector<2x32xf32>
    %59 = tpu.matmul %56, %58, %cst_52 {dimension_numbers = #tpu.dot_dimension_numbers<[1], [0], [0], [1], [0, 0, 1, 1], [], []>} : vector<2x16xf32>, vector<16x32xf32>, vector<2x32xf32> -> vector<2x32xf32>
    %60 = arith.addf %55, %59 : vector<2x32xf32>
    %61 = vector.extract_strided_slice %38 {offsets = [8, 0], sizes = [2, 16], strides = [1, 1]} : vector<32x16xf32> to vector<2x16xf32>
    %c4 = arith.constant 4 : index
    %c0_53 = arith.constant 0 : index
    %c0_54 = arith.constant 0 : index
    %62 = vector.load %arg7[%c4, %c0_53, %c0_54] : memref<16x16x32xf32, #tpu.memory_space<vmem>>, vector<1x16x32xf32>
    %63 = vector.shape_cast %62 : vector<1x16x32xf32> to vector<16x32xf32>
    %cst_55 = arith.constant dense<0.000000e+00> : vector<2x32xf32>
    %64 = tpu.matmul %61, %63, %cst_55 {dimension_numbers = #tpu.dot_dimension_numbers<[1], [0], [0], [1], [0, 0, 1, 1], [], []>} : vector<2x16xf32>, vector<16x32xf32>, vector<2x32xf32> -> vector<2x32xf32>
    %65 = arith.addf %60, %64 : vector<2x32xf32>
    %66 = vector.extract_strided_slice %38 {offsets = [10, 0], sizes = [2, 16], strides = [1, 1]} : vector<32x16xf32> to vector<2x16xf32>
    %c5 = arith.constant 5 : index
    %c0_56 = arith.constant 0 : index
    %c0_57 = arith.constant 0 : index
    %67 = vector.load %arg7[%c5, %c0_56, %c0_57] : memref<16x16x32xf32, #tpu.memory_space<vmem>>, vector<1x16x32xf32>
    %68 = vector.shape_cast %67 : vector<1x16x32xf32> to vector<16x32xf32>
    %cst_58 = arith.constant dense<0.000000e+00> : vector<2x32xf32>
    %69 = tpu.matmul %66, %68, %cst_58 {dimension_numbers = #tpu.dot_dimension_numbers<[1], [0], [0], [1], [0, 0, 1, 1], [], []>} : vector<2x16xf32>, vector<16x32xf32>, vector<2x32xf32> -> vector<2x32xf32>
    %70 = arith.addf %65, %69 : vector<2x32xf32>
    %71 = vector.extract_strided_slice %38 {offsets = [12, 0], sizes = [2, 16], strides = [1, 1]} : vector<32x16xf32> to vector<2x16xf32>
    %c6 = arith.constant 6 : index
    %c0_59 = arith.constant 0 : index
    %c0_60 = arith.constant 0 : index
    %72 = vector.load %arg7[%c6, %c0_59, %c0_60] : memref<16x16x32xf32, #tpu.memory_space<vmem>>, vector<1x16x32xf32>
    %73 = vector.shape_cast %72 : vector<1x16x32xf32> to vector<16x32xf32>
    %cst_61 = arith.constant dense<0.000000e+00> : vector<2x32xf32>
    %74 = tpu.matmul %71, %73, %cst_61 {dimension_numbers = #tpu.dot_dimension_numbers<[1], [0], [0], [1], [0, 0, 1, 1], [], []>} : vector<2x16xf32>, vector<16x32xf32>, vector<2x32xf32> -> vector<2x32xf32>
    %75 = arith.addf %70, %74 : vector<2x32xf32>
    %76 = vector.extract_strided_slice %38 {offsets = [14, 0], sizes = [2, 16], strides = [1, 1]} : vector<32x16xf32> to vector<2x16xf32>
    %c7 = arith.constant 7 : index
    %c0_62 = arith.constant 0 : index
    %c0_63 = arith.constant 0 : index
    %77 = vector.load %arg7[%c7, %c0_62, %c0_63] : memref<16x16x32xf32, #tpu.memory_space<vmem>>, vector<1x16x32xf32>
    %78 = vector.shape_cast %77 : vector<1x16x32xf32> to vector<16x32xf32>
    %cst_64 = arith.constant dense<0.000000e+00> : vector<2x32xf32>
    %79 = tpu.matmul %76, %78, %cst_64 {dimension_numbers = #tpu.dot_dimension_numbers<[1], [0], [0], [1], [0, 0, 1, 1], [], []>} : vector<2x16xf32>, vector<16x32xf32>, vector<2x32xf32> -> vector<2x32xf32>
    %80 = arith.addf %75, %79 : vector<2x32xf32>
    %81 = vector.extract_strided_slice %38 {offsets = [16, 0], sizes = [2, 16], strides = [1, 1]} : vector<32x16xf32> to vector<2x16xf32>
    %c8 = arith.constant 8 : index
    %c0_65 = arith.constant 0 : index
    %c0_66 = arith.constant 0 : index
    %82 = vector.load %arg7[%c8, %c0_65, %c0_66] : memref<16x16x32xf32, #tpu.memory_space<vmem>>, vector<1x16x32xf32>
    %83 = vector.shape_cast %82 : vector<1x16x32xf32> to vector<16x32xf32>
    %cst_67 = arith.constant dense<0.000000e+00> : vector<2x32xf32>
    %84 = tpu.matmul %81, %83, %cst_67 {dimension_numbers = #tpu.dot_dimension_numbers<[1], [0], [0], [1], [0, 0, 1, 1], [], []>} : vector<2x16xf32>, vector<16x32xf32>, vector<2x32xf32> -> vector<2x32xf32>
    %85 = arith.addf %80, %84 : vector<2x32xf32>
    %86 = vector.extract_strided_slice %38 {offsets = [18, 0], sizes = [2, 16], strides = [1, 1]} : vector<32x16xf32> to vector<2x16xf32>
    %c9 = arith.constant 9 : index
    %c0_68 = arith.constant 0 : index
    %c0_69 = arith.constant 0 : index
    %87 = vector.load %arg7[%c9, %c0_68, %c0_69] : memref<16x16x32xf32, #tpu.memory_space<vmem>>, vector<1x16x32xf32>
    %88 = vector.shape_cast %87 : vector<1x16x32xf32> to vector<16x32xf32>
    %cst_70 = arith.constant dense<0.000000e+00> : vector<2x32xf32>
    %89 = tpu.matmul %86, %88, %cst_70 {dimension_numbers = #tpu.dot_dimension_numbers<[1], [0], [0], [1], [0, 0, 1, 1], [], []>} : vector<2x16xf32>, vector<16x32xf32>, vector<2x32xf32> -> vector<2x32xf32>
    %90 = arith.addf %85, %89 : vector<2x32xf32>
    %91 = vector.extract_strided_slice %38 {offsets = [20, 0], sizes = [2, 16], strides = [1, 1]} : vector<32x16xf32> to vector<2x16xf32>
    %c10 = arith.constant 10 : index
    %c0_71 = arith.constant 0 : index
    %c0_72 = arith.constant 0 : index
    %92 = vector.load %arg7[%c10, %c0_71, %c0_72] : memref<16x16x32xf32, #tpu.memory_space<vmem>>, vector<1x16x32xf32>
    %93 = vector.shape_cast %92 : vector<1x16x32xf32> to vector<16x32xf32>
    %cst_73 = arith.constant dense<0.000000e+00> : vector<2x32xf32>
    %94 = tpu.matmul %91, %93, %cst_73 {dimension_numbers = #tpu.dot_dimension_numbers<[1], [0], [0], [1], [0, 0, 1, 1], [], []>} : vector<2x16xf32>, vector<16x32xf32>, vector<2x32xf32> -> vector<2x32xf32>
    %95 = arith.addf %90, %94 : vector<2x32xf32>
    %96 = vector.extract_strided_slice %38 {offsets = [22, 0], sizes = [2, 16], strides = [1, 1]} : vector<32x16xf32> to vector<2x16xf32>
    %c11 = arith.constant 11 : index
    %c0_74 = arith.constant 0 : index
    %c0_75 = arith.constant 0 : index
    %97 = vector.load %arg7[%c11, %c0_74, %c0_75] : memref<16x16x32xf32, #tpu.memory_space<vmem>>, vector<1x16x32xf32>
    %98 = vector.shape_cast %97 : vector<1x16x32xf32> to vector<16x32xf32>
    %cst_76 = arith.constant dense<0.000000e+00> : vector<2x32xf32>
    %99 = tpu.matmul %96, %98, %cst_76 {dimension_numbers = #tpu.dot_dimension_numbers<[1], [0], [0], [1], [0, 0, 1, 1], [], []>} : vector<2x16xf32>, vector<16x32xf32>, vector<2x32xf32> -> vector<2x32xf32>
    %100 = arith.addf %95, %99 : vector<2x32xf32>
    %101 = vector.extract_strided_slice %38 {offsets = [24, 0], sizes = [2, 16], strides = [1, 1]} : vector<32x16xf32> to vector<2x16xf32>
    %c12 = arith.constant 12 : index
    %c0_77 = arith.constant 0 : index
    %c0_78 = arith.constant 0 : index
    %102 = vector.load %arg7[%c12, %c0_77, %c0_78] : memref<16x16x32xf32, #tpu.memory_space<vmem>>, vector<1x16x32xf32>
    %103 = vector.shape_cast %102 : vector<1x16x32xf32> to vector<16x32xf32>
    %cst_79 = arith.constant dense<0.000000e+00> : vector<2x32xf32>
    %104 = tpu.matmul %101, %103, %cst_79 {dimension_numbers = #tpu.dot_dimension_numbers<[1], [0], [0], [1], [0, 0, 1, 1], [], []>} : vector<2x16xf32>, vector<16x32xf32>, vector<2x32xf32> -> vector<2x32xf32>
    %105 = arith.addf %100, %104 : vector<2x32xf32>
    %106 = vector.extract_strided_slice %38 {offsets = [26, 0], sizes = [2, 16], strides = [1, 1]} : vector<32x16xf32> to vector<2x16xf32>
    %c13 = arith.constant 13 : index
    %c0_80 = arith.constant 0 : index
    %c0_81 = arith.constant 0 : index
    %107 = vector.load %arg7[%c13, %c0_80, %c0_81] : memref<16x16x32xf32, #tpu.memory_space<vmem>>, vector<1x16x32xf32>
    %108 = vector.shape_cast %107 : vector<1x16x32xf32> to vector<16x32xf32>
    %cst_82 = arith.constant dense<0.000000e+00> : vector<2x32xf32>
    %109 = tpu.matmul %106, %108, %cst_82 {dimension_numbers = #tpu.dot_dimension_numbers<[1], [0], [0], [1], [0, 0, 1, 1], [], []>} : vector<2x16xf32>, vector<16x32xf32>, vector<2x32xf32> -> vector<2x32xf32>
    %110 = arith.addf %105, %109 : vector<2x32xf32>
    %111 = vector.extract_strided_slice %38 {offsets = [28, 0], sizes = [2, 16], strides = [1, 1]} : vector<32x16xf32> to vector<2x16xf32>
    %c14 = arith.constant 14 : index
    %c0_83 = arith.constant 0 : index
    %c0_84 = arith.constant 0 : index
    %112 = vector.load %arg7[%c14, %c0_83, %c0_84] : memref<16x16x32xf32, #tpu.memory_space<vmem>>, vector<1x16x32xf32>
    %113 = vector.shape_cast %112 : vector<1x16x32xf32> to vector<16x32xf32>
    %cst_85 = arith.constant dense<0.000000e+00> : vector<2x32xf32>
    %114 = tpu.matmul %111, %113, %cst_85 {dimension_numbers = #tpu.dot_dimension_numbers<[1], [0], [0], [1], [0, 0, 1, 1], [], []>} : vector<2x16xf32>, vector<16x32xf32>, vector<2x32xf32> -> vector<2x32xf32>
    %115 = arith.addf %110, %114 : vector<2x32xf32>
    %116 = vector.extract_strided_slice %38 {offsets = [30, 0], sizes = [2, 16], strides = [1, 1]} : vector<32x16xf32> to vector<2x16xf32>
    %c15 = arith.constant 15 : index
    %c0_86 = arith.constant 0 : index
    %c0_87 = arith.constant 0 : index
    %117 = vector.load %arg7[%c15, %c0_86, %c0_87] : memref<16x16x32xf32, #tpu.memory_space<vmem>>, vector<1x16x32xf32>
    %118 = vector.shape_cast %117 : vector<1x16x32xf32> to vector<16x32xf32>
    %cst_88 = arith.constant dense<0.000000e+00> : vector<2x32xf32>
    %119 = tpu.matmul %116, %118, %cst_88 {dimension_numbers = #tpu.dot_dimension_numbers<[1], [0], [0], [1], [0, 0, 1, 1], [], []>} : vector<2x16xf32>, vector<16x32xf32>, vector<2x32xf32> -> vector<2x32xf32>
    %120 = arith.addf %115, %119 : vector<2x32xf32>
    %121 = vector.broadcast %39 : vector<1x32xf32> to vector<2x32xf32>
    %122 = arith.addf %120, %121 : vector<2x32xf32>
    %cst_89 = arith.constant 0.000000e+00 : f32
    %123 = vector.broadcast %cst_89 : f32 to vector<2x32xf32>
    %124 = arith.maximumf %122, %123 : vector<2x32xf32>
    %c0_90 = arith.constant 0 : index
    %c0_91 = arith.constant 0 : index
    %125 = vector.load %arg9[%c0_90, %c0_91] : memref<32x8xf32, #tpu.memory_space<vmem>>, vector<32x8xf32>
    %c0_92 = arith.constant 0 : index
    %c0_93 = arith.constant 0 : index
    %126 = vector.load %arg10[%c0_92, %c0_93] : memref<1x8xf32, #tpu.memory_space<vmem>>, vector<1x8xf32>
    %cst_94 = arith.constant dense<0.000000e+00> : vector<2x8xf32>
    %127 = tpu.matmul %124, %125, %cst_94 {dimension_numbers = #tpu.dot_dimension_numbers<[1], [0], [0], [1], [0, 0, 1, 1], [], []>} : vector<2x32xf32>, vector<32x8xf32>, vector<2x8xf32> -> vector<2x8xf32>
    %128 = vector.broadcast %126 : vector<1x8xf32> to vector<2x8xf32>
    %129 = arith.addf %127, %128 : vector<2x8xf32>
    %c0_95 = arith.constant 0 : index
    %c0_96 = arith.constant 0 : index
    %c0_97 = arith.constant 0 : index
    %130 = vector.load %arg11[%c0_95, %c0_96, %c0_97] : memref<1x2x8xf32, #tpu.memory_space<vmem>>, vector<1x2x8xf32>
    %131 = vector.shape_cast %130 : vector<1x2x8xf32> to vector<2x8xf32>
    %132 = vector.shape_cast %129 : vector<2x8xf32> to vector<1x2x8xf32>
    tpu.vector_store %arg11[%c0_95, %c0_96, %c0_97], %132 {strides = array<i32>} : memref<1x2x8xf32, #tpu.memory_space<vmem>>, vector<1x2x8xf32>,
    return
  }
  func.func @transform_0(%arg0: i32) -> (i32, i32, i32) {
    %c0_i32 = arith.constant 0 : i32
    %c0_i32_0 = arith.constant 0 : i32
    %c0_i32_1 = arith.constant 0 : i32
    return %arg0, %c0_i32, %c0_i32_0 : i32, i32, i32
  }
  func.func @transform_1(%arg0: i32) -> (i32, i32) {
    %c0_i32 = arith.constant 0 : i32
    %c0_i32_0 = arith.constant 0 : i32
    %c0_i32_1 = arith.constant 0 : i32
    return %c0_i32, %c0_i32_0 : i32, i32
  }
  func.func @transform_2(%arg0: i32) -> (i32, i32, i32) {
    %c0_i32 = arith.constant 0 : i32
    %c0_i32_0 = arith.constant 0 : i32
    %c0_i32_1 = arith.constant 0 : i32
    %c0_i32_2 = arith.constant 0 : i32
    return %c0_i32, %c0_i32_0, %c0_i32_1 : i32, i32, i32
  }
  func.func @transform_3(%arg0: i32) -> (i32, i32) {
    %c0_i32 = arith.constant 0 : i32
    %c0_i32_0 = arith.constant 0 : i32
    %c0_i32_1 = arith.constant 0 : i32
    return %c0_i32, %c0_i32_0 : i32, i32
  }
  func.func @transform_4(%arg0: i32) -> (i32, i32, i32) {
    %c0_i32 = arith.constant 0 : i32
    %c0_i32_0 = arith.constant 0 : i32
    %c0_i32_1 = arith.constant 0 : i32
    %c0_i32_2 = arith.constant 0 : i32
    return %c0_i32, %c0_i32_0, %c0_i32_1 : i32, i32, i32
  }
  func.func @transform_5(%arg0: i32) -> (i32, i32) {
    %c0_i32 = arith.constant 0 : i32
    %c0_i32_0 = arith.constant 0 : i32
    %c0_i32_1 = arith.constant 0 : i32
    return %c0_i32, %c0_i32_0 : i32, i32
  }
  func.func @transform_6(%arg0: i32) -> (i32, i32, i32) {
    %c0_i32 = arith.constant 0 : i32
    %c0_i32_0 = arith.constant 0 : i32
    %c0_i32_1 = arith.constant 0 : i32
    %c0_i32_2 = arith.constant 0 : i32
    return %c0_i32, %c0_i32_0, %c0_i32_1 : i32, i32, i32
  }
  func.func @transform_7(%arg0: i32) -> (i32, i32) {
    %c0_i32 = arith.constant 0 : i32
    %c0_i32_0 = arith.constant 0 : i32
    %c0_i32_1 = arith.constant 0 : i32
    return %c0_i32, %c0_i32_0 : i32, i32
  }
  func.func @transform_8(%arg0: i32) -> (i32, i32) {
    %c0_i32 = arith.constant 0 : i32
    %c0_i32_0 = arith.constant 0 : i32
    %c0_i32_1 = arith.constant 0 : i32
    return %c0_i32, %c0_i32_0 : i32, i32
  }
  func.func @transform_9(%arg0: i32) -> (i32, i32) {
    %c0_i32 = arith.constant 0 : i32
    %c0_i32_0 = arith.constant 0 : i32
    %c0_i32_1 = arith.constant 0 : i32
    return %c0_i32, %c0_i32_0 : i32, i32
  }
  func.func @transform_10(%arg0: i32) -> (i32, i32, i32) {
    %c0_i32 = arith.constant 0 : i32
    %c0_i32_0 = arith.constant 0 : i32
    %c0_i32_1 = arith.constant 0 : i32
    return %arg0, %c0_i32, %c0_i32_0 : i32, i32, i32
  }
}

</mosaic_0001>

<llo_original>
// kernel: selection_gnn_forward.1
$region0: #{selection_gnn_forward.1}
  #allocation0 [shape = 'u32[]', space=smem, size = 0x4, offset = 0x4, fixed_abs, tag = 'smem constant byte address 0x4 - core index']
  #allocation1 [shape = 'u32[144,128]{1,0:T(1,128)}', space=vmem, size = 0x12000, scoped, tag = 'internal scratch']
  %s0 = inlined_call_operand.vmem [shape: f32[2,8,16], index: 0, kind: input, shape index: {}]
  %s1 = inlined_call_operand.vmem [shape: f32[16,16], index: 1, kind: input, shape index: {}]
  %s2 = inlined_call_operand.vmem [shape: f32[3,16,8], index: 2, kind: input, shape index: {}]
  %s3 = inlined_call_operand.vmem [shape: f32[16,1], index: 3, kind: input, shape index: {}]
  %s4 = inlined_call_operand.vmem [shape: f32[3,32,16], index: 4, kind: input, shape index: {}]
  %s5 = inlined_call_operand.vmem [shape: f32[32,1], index: 5, kind: input, shape index: {}]
  %s6 = inlined_call_operand.vmem [shape: f32[16,16,32], index: 6, kind: input, shape index: {}]
  %s7 = inlined_call_operand.vmem [shape: f32[1,32], index: 7, kind: input, shape index: {}]
  %s8 = inlined_call_operand.vmem [shape: f32[32,8], index: 8, kind: input, shape index: {}]
  %s9 = inlined_call_operand.vmem [shape: f32[1,8], index: 9, kind: input, shape index: {}]
  %s10 = inlined_call_operand.hbm [shape: f32[2,2,8], index: 10, kind: output, shape index: {}]
  %s11 = sld [smem:[#allocation0]]
  $region73: #{selection_gnn_forward.1} parent=0
    _
  %s13 = ssub.s32 1, %s11
  %s14 = scalar_select 0, %s13, %s11
  $region1: #{selection_gnn_forward.1} parent=0
    #allocation2 [shape = 'u8[2048]{0}', space=vmem, size = 0x800, scoped, tag = 'output window, operand 0']
    #allocation3 [shape = 's32[2]{0}', space=sflag, size = 0x8, scoped, tag = 'scoped memory for selection_gnn_forward.1']
    %15 = vsyncpa [#allocation3], 0
    %s16 = scalar_lea.sflag [#allocation3], 1
    %17 = vsyncpa %s16, 0
    loop: start=0, step=1, limit=4
    $region2: #{selection_gnn_forward.1} parent=1 // loop_pre_header
      _
    $region3: #{selection_gnn_forward.1} parent=1 // loop_header
      %s19 = sphi 0, %s23
      %p20 = scmp.ge.s32.totalorder %s19, 4
      %s29 = sphi 0, %s31
      %s32 = sphi 0, %s29
      %s33 = sphi 0, %s32
      %s49 = sphi 0, %s33
      %s53 = sphi 0, %s53
      %s55 = sphi 0, %s53
      %s56 = sphi 0, %s55
      %s70 = sphi 0, %s56
      %s74 = sphi 0, %s74
      %s76 = sphi 0, %s74
      %s77 = sphi 0, %s76
      %s91 = sphi 0, %s77
      %s95 = sphi 0, %s95
      %s97 = sphi 0, %s95
      %s98 = sphi 0, %s97
      %s112 = sphi 0, %s98
      %s116 = sphi 0, %s116
      %s118 = sphi 0, %s116
      %s119 = sphi 0, %s118
      %s133 = sphi 0, %s119
      %s137 = sphi 0, %s137
      %s139 = sphi 0, %s137
      %s140 = sphi 0, %s139
      %s154 = sphi 0, %s140
      %s158 = sphi 0, %s158
      %s160 = sphi 0, %s158
      %s161 = sphi 0, %s160
      %s175 = sphi 0, %s161
      %s179 = sphi 0, %s179
      %s181 = sphi 0, %s179
      %s182 = sphi 0, %s181
      %s196 = sphi 0, %s182
      %s200 = sphi 0, %s200
      %s202 = sphi 0, %s200
      %s203 = sphi 0, %s202
      %s217 = sphi 0, %s203
      %s221 = sphi 0, %s221
      %s223 = sphi 0, %s221
      %s224 = sphi 0, %s223
      %s238 = sphi 0, %s224
      %s244 = sphi 0, %s246
      %s247 = sphi 0, %s244
      %s248 = sphi 0, %s247
      %s264 = sphi 0, %s248
    $region4: #{selection_gnn_forward.1} parent=1 // loop_header_branch
      %22 = sbr.rel (%p20) target = $region8
    $region5: #{selection_gnn_forward.1} parent=1 // loop_body
      %s24 = ssub.s32 %s19, 1
      %s25 = ssub.s32 %s19, 2
      %s26 = sadd.s32 %s19, 1
      %s27 = ssub.s32 %s19, %s26
      %p28 = scmp.eq.s32.totalorder %s27, 0
      %s30 = sadd.s32 %s29, 1
      %s31 = scalar_select %p28, %s29, %s30
      %p34 = pneg %p28
      %p35 = scmp.eq.s32.totalorder %s19, 1
      %p36 = por %p34, %p35
      %p37 = scmp.ne.s32.totalorder %s29, %s32
      %p38 = scmp.eq.s32.totalorder %s19, 0
      %p39 = por %p37, %p38
      %p40 = scmp.ne.s32.totalorder %s29, %s32
      %p41 = scmp.eq.s32.totalorder %s24, 1
      %p42 = por %p40, %p41
      %p43 = scmp.ne.s32.totalorder %s32, %s33
      %p44 = scmp.eq.s32.totalorder %s24, 0
      %p45 = por %p43, %p44
      %p46 = scmp.ne.s32.totalorder %s32, %s33
      %p47 = scmp.eq.s32.totalorder %s25, 1
      %p48 = por %p46, %p47
      %p50 = scmp.ne.s32.totalorder %s33, %s49
      %p51 = scmp.eq.s32.totalorder %s25, 0
      %p52 = por %p50, %p51
      %s54 = sadd.s32 %s53, 1
      %p57 = scmp.eq.s32.totalorder %s19, 1
      %p58 = scmp.ne.s32.totalorder %s53, %s55
      %p59 = scmp.eq.s32.totalorder %s19, 0
      %p60 = por %p58, %p59
      %p61 = scmp.ne.s32.totalorder %s53, %s55
      %p62 = scmp.eq.s32.totalorder %s24, 1
      %p63 = por %p61, %p62
      %p64 = scmp.ne.s32.totalorder %s55, %s56
      %p65 = scmp.eq.s32.totalorder %s24, 0
      %p66 = por %p64, %p65
      %p67 = scmp.ne.s32.totalorder %s55, %s56
      %p68 = scmp.eq.s32.totalorder %s25, 1
      %p69 = por %p67, %p68
      %p71 = scmp.ne.s32.totalorder %s56, %s70
      %p72 = scmp.eq.s32.totalorder %s25, 0
      %p73 = por %p71, %p72
      %s75 = sadd.s32 %s74, 1
      %p78 = scmp.eq.s32.totalorder %s19, 1
      %p79 = scmp.ne.s32.totalorder %s74, %s76
      %p80 = scmp.eq.s32.totalorder %s19, 0
      %p81 = por %p79, %p80
      %p82 = scmp.ne.s32.totalorder %s74, %s76
      %p83 = scmp.eq.s32.totalorder %s24, 1
      %p84 = por %p82, %p83
      %p85 = scmp.ne.s32.totalorder %s76, %s77
      %p86 = scmp.eq.s32.totalorder %s24, 0
      %p87 = por %p85, %p86
      %p88 = scmp.ne.s32.totalorder %s76, %s77
      %p89 = scmp.eq.s32.totalorder %s25, 1
      %p90 = por %p88, %p89
      %p92 = scmp.ne.s32.totalorder %s77, %s91
      %p93 = scmp.eq.s32.totalorder %s25, 0
      %p94 = por %p92, %p93
      %s96 = sadd.s32 %s95, 1
      %p99 = scmp.eq.s32.totalorder %s19, 1
      %p100 = scmp.ne.s32.totalorder %s95, %s97
      %p101 = scmp.eq.s32.totalorder %s19, 0
      %p102 = por %p100, %p101
      %p103 = scmp.ne.s32.totalorder %s95, %s97
      %p104 = scmp.eq.s32.totalorder %s24, 1
      %p105 = por %p103, %p104
      %p106 = scmp.ne.s32.totalorder %s97, %s98
      %p107 = scmp.eq.s32.totalorder %s24, 0
      %p108 = por %p106, %p107
      %p109 = scmp.ne.s32.totalorder %s97, %s98
      %p110 = scmp.eq.s32.totalorder %s25, 1
      %p111 = por %p109, %p110
      %p113 = scmp.ne.s32.totalorder %s98, %s112
      %p114 = scmp.eq.s32.totalorder %s25, 0
      %p115 = por %p113, %p114
      %s117 = sadd.s32 %s116, 1
      %p120 = scmp.eq.s32.totalorder %s19, 1
      %p121 = scmp.ne.s32.totalorder %s116, %s118
      %p122 = scmp.eq.s32.totalorder %s19, 0
      %p123 = por %p121, %p122
      %p124 = scmp.ne.s32.totalorder %s116, %s118
      %p125 = scmp.eq.s32.totalorder %s24, 1
      %p126 = por %p124, %p125
      %p127 = scmp.ne.s32.totalorder %s118, %s119
      %p128 = scmp.eq.s32.totalorder %s24, 0
      %p129 = por %p127, %p128
      %p130 = scmp.ne.s32.totalorder %s118, %s119
      %p131 = scmp.eq.s32.totalorder %s25, 1
      %p132 = por %p130, %p131
      %p134 = scmp.ne.s32.totalorder %s119, %s133
      %p135 = scmp.eq.s32.totalorder %s25, 0
      %p136 = por %p134, %p135
      %s138 = sadd.s32 %s137, 1
      %p141 = scmp.eq.s32.totalorder %s19, 1
      %p142 = scmp.ne.s32.totalorder %s137, %s139
      %p143 = scmp.eq.s32.totalorder %s19, 0
      %p144 = por %p142, %p143
      %p145 = scmp.ne.s32.totalorder %s137, %s139
      %p146 = scmp.eq.s32.totalorder %s24, 1
      %p147 = por %p145, %p146
      %p148 = scmp.ne.s32.totalorder %s139, %s140
      %p149 = scmp.eq.s32.totalorder %s24, 0
      %p150 = por %p148, %p149
      %p151 = scmp.ne.s32.totalorder %s139, %s140
      %p152 = scmp.eq.s32.totalorder %s25, 1
      %p153 = por %p151, %p152
      %p155 = scmp.ne.s32.totalorder %s140, %s154
      %p156 = scmp.eq.s32.totalorder %s25, 0
      %p157 = por %p155, %p156
      %s159 = sadd.s32 %s158, 1
      %p162 = scmp.eq.s32.totalorder %s19, 1
      %p163 = scmp.ne.s32.totalorder %s158, %s160
      %p164 = scmp.eq.s32.totalorder %s19, 0
      %p165 = por %p163, %p164
      %p166 = scmp.ne.s32.totalorder %s158, %s160
      %p167 = scmp.eq.s32.totalorder %s24, 1
      %p168 = por %p166, %p167
      %p169 = scmp.ne.s32.totalorder %s160, %s161
      %p170 = scmp.eq.s32.totalorder %s24, 0
      %p171 = por %p169, %p170
      %p172 = scmp.ne.s32.totalorder %s160, %s161
      %p173 = scmp.eq.s32.totalorder %s25, 1
      %p174 = por %p172, %p173
      %p176 = scmp.ne.s32.totalorder %s161, %s175
      %p177 = scmp.eq.s32.totalorder %s25, 0
      %p178 = por %p176, %p177
      %s180 = sadd.s32 %s179, 1
      %p183 = scmp.eq.s32.totalorder %s19, 1
      %p184 = scmp.ne.s32.totalorder %s179, %s181
      %p185 = scmp.eq.s32.totalorder %s19, 0
      %p186 = por %p184, %p185
      %p187 = scmp.ne.s32.totalorder %s179, %s181
      %p188 = scmp.eq.s32.totalorder %s24, 1
      %p189 = por %p187, %p188
      %p190 = scmp.ne.s32.totalorder %s181, %s182
      %p191 = scmp.eq.s32.totalorder %s24, 0
      %p192 = por %p190, %p191
      %p193 = scmp.ne.s32.totalorder %s181, %s182
      %p194 = scmp.eq.s32.totalorder %s25, 1
      %p195 = por %p193, %p194
      %p197 = scmp.ne.s32.totalorder %s182, %s196
      %p198 = scmp.eq.s32.totalorder %s25, 0
      %p199 = por %p197, %p198
      %s201 = sadd.s32 %s200, 1
      %p204 = scmp.eq.s32.totalorder %s19, 1
      %p205 = scmp.ne.s32.totalorder %s200, %s202
      %p206 = scmp.eq.s32.totalorder %s19, 0
      %p207 = por %p205, %p206
      %p208 = scmp.ne.s32.totalorder %s200, %s202
      %p209 = scmp.eq.s32.totalorder %s24, 1
      %p210 = por %p208, %p209
      %p211 = scmp.ne.s32.totalorder %s202, %s203
      %p212 = scmp.eq.s32.totalorder %s24, 0
      %p213 = por %p211, %p212
      %p214 = scmp.ne.s32.totalorder %s202, %s203
      %p215 = scmp.eq.s32.totalorder %s25, 1
      %p216 = por %p214, %p215
      %p218 = scmp.ne.s32.totalorder %s203, %s217
      %p219 = scmp.eq.s32.totalorder %s25, 0
      %p220 = por %p218, %p219
      %s222 = sadd.s32 %s221, 1
      %p225 = scmp.eq.s32.totalorder %s19, 1
      %p226 = scmp.ne.s32.totalorder %s221, %s223
      %p227 = scmp.eq.s32.totalorder %s19, 0
      %p228 = por %p226, %p227
      %p229 = scmp.ne.s32.totalorder %s221, %s223
      %p230 = scmp.eq.s32.totalorder %s24, 1
      %p231 = por %p229, %p230
      %p232 = scmp.ne.s32.totalorder %s223, %s224
      %p233 = scmp.eq.s32.totalorder %s24, 0
      %p234 = por %p232, %p233
      %p235 = scmp.ne.s32.totalorder %s223, %s224
      %p236 = scmp.eq.s32.totalorder %s25, 1
      %p237 = por %p235, %p236
      %p239 = scmp.ne.s32.totalorder %s224, %s238
      %p240 = scmp.eq.s32.totalorder %s25, 0
      %p241 = por %p239, %p240
      %s242 = ssub.s32 %s19, %s26
      %p243 = scmp.eq.s32.totalorder %s242, 0
      %s245 = sadd.s32 %s244, 1
      %s246 = scalar_select %p243, %s244, %s245
      %p249 = pneg %p243
      %p250 = scmp.eq.s32.totalorder %s19, 1
      %p251 = por %p249, %p250
      %p252 = scmp.ne.s32.totalorder %s244, %s247
      %p253 = scmp.eq.s32.totalorder %s19, 0
      %p254 = por %p252, %p253
      %p255 = scmp.ne.s32.totalorder %s244, %s247
      %p256 = scmp.eq.s32.totalorder %s24, 1
      %p257 = por %p255, %p256
      %p258 = scmp.ne.s32.totalorder %s247, %s248
      %p259 = scmp.eq.s32.totalorder %s24, 0
      %p260 = por %p258, %p259
      %p261 = scmp.ne.s32.totalorder %s247, %s248
      %p262 = scmp.eq.s32.totalorder %s25, 1
      %p263 = por %p261, %p262
      %p265 = scmp.ne.s32.totalorder %s248, %s264
      %p266 = scmp.eq.s32.totalorder %s25, 0
      %p267 = por %p265, %p266
      %p268 = scmp.le.s32.totalorder 1, %s19
      %p269 = scmp.lt.s32.totalorder %s19, 3
      %p270 = pnand %p268, %p269
      %p271 = pneg %p270
      // Predicated region
      $region9: #{selection_gnn_forward.1} parent=5 // pred_check
        _
      $region10: #{selection_gnn_forward.1} parent=5 // pred_check_branch
        %273 = sbr.rel (%p270) target = $region12
      $region11: #{selection_gnn_forward.1} parent=5 // pred_region
        %s274 = ssub.s32 %s19, 1
        // Predicated region
        $region13: #{selection_gnn_forward.1} parent=11 // pred_check
          %p275 = pneg %p66
        $region14: #{selection_gnn_forward.1} parent=11 // pred_check_branch
          %277 = sbr.rel (%p275) target = $region16
        $region15: #{selection_gnn_forward.1} parent=11 // pred_region
          _
        $region16: #{selection_gnn_forward.1} parent=11 // pred_fallthru
          _
        // Predicated region
        $region17: #{selection_gnn_forward.1} parent=11 // pred_check
          %p278 = pneg %p87
        $region18: #{selection_gnn_forward.1} parent=11 // pred_check_branch
          %280 = sbr.rel (%p278) target = $region20
        $region19: #{selection_gnn_forward.1} parent=11 // pred_region
          _
        $region20: #{selection_gnn_forward.1} parent=11 // pred_fallthru
          _
        // Predicated region
        $region21: #{selection_gnn_forward.1} parent=11 // pred_check
          %p281 = pneg %p108
        $region22: #{selection_gnn_forward.1} parent=11 // pred_check_branch
          %283 = sbr.rel (%p281) target = $region24
        $region23: #{selection_gnn_forward.1} parent=11 // pred_region
          _
        $region24: #{selection_gnn_forward.1} parent=11 // pred_fallthru
          _
        // Predicated region
        $region25: #{selection_gnn_forward.1} parent=11 // pred_check
          %p284 = pneg %p129
        $region26: #{selection_gnn_forward.1} parent=11 // pred_check_branch
          %286 = sbr.rel (%p284) target = $region28
        $region27: #{selection_gnn_forward.1} parent=11 // pred_region
          _
        $region28: #{selection_gnn_forward.1} parent=11 // pred_fallthru
          _
        // Predicated region
        $region29: #{selection_gnn_forward.1} parent=11 // pred_check
          %p287 = pneg %p150
        $region30: #{selection_gnn_forward.1} parent=11 // pred_check_branch
          %289 = sbr.rel (%p287) target = $region32
        $region31: #{selection_gnn_forward.1} parent=11 // pred_region
          _
        $region32: #{selection_gnn_forward.1} parent=11 // pred_fallthru
          _
        // Predicated region
        $region33: #{selection_gnn_forward.1} parent=11 // pred_check
          %p290 = pneg %p171
        $region34: #{selection_gnn_forward.1} parent=11 // pred_check_branch
          %292 = sbr.rel (%p290) target = $region36
        $region35: #{selection_gnn_forward.1} parent=11 // pred_region
          _
        $region36: #{selection_gnn_forward.1} parent=11 // pred_fallthru
          _
        // Predicated region
        $region37: #{selection_gnn_forward.1} parent=11 // pred_check
          %p293 = pneg %p192
        $region38: #{selection_gnn_forward.1} parent=11 // pred_check_branch
          %295 = sbr.rel (%p293) target = $region40
        $region39: #{selection_gnn_forward.1} parent=11 // pred_region
          _
        $region40: #{selection_gnn_forward.1} parent=11 // pred_fallthru
          _
        // Predicated region
        $region41: #{selection_gnn_forward.1} parent=11 // pred_check
          %p296 = pneg %p213
        $region42: #{selection_gnn_forward.1} parent=11 // pred_check_branch
          %298 = sbr.rel (%p296) target = $region44
        $region43: #{selection_gnn_forward.1} parent=11 // pred_region
          _
        $region44: #{selection_gnn_forward.1} parent=11 // pred_fallthru
          _
        // Predicated region
        $region45: #{selection_gnn_forward.1} parent=11 // pred_check
          %p299 = pneg %p234
        $region46: #{selection_gnn_forward.1} parent=11 // pred_check_branch
          %301 = sbr.rel (%p299) target = $region48
        $region47: #{selection_gnn_forward.1} parent=11 // pred_region
          _
        $region48: #{selection_gnn_forward.1} parent=11 // pred_fallthru
          _
      $region12: #{selection_gnn_forward.1} parent=5 // pred_fallthru
        _
      %p302 = scmp.lt.s32.totalorder %s19, 2
      // Predicated region
      $region49: #{selection_gnn_forward.1} parent=5 // pred_check
        %p303 = pneg %p302
      $region50: #{selection_gnn_forward.1} parent=5 // pred_check_branch
        %305 = sbr.rel (%p303) target = $region52
      $region51: #{selection_gnn_forward.1} parent=5 // pred_region
        // Predicated region
        $region53: #{selection_gnn_forward.1} parent=51 // pred_check
          %p306 = pneg %p39
        $region54: #{selection_gnn_forward.1} parent=51 // pred_check_branch
          %308 = sbr.rel (%p306) target = $region56
        $region55: #{selection_gnn_forward.1} parent=51 // pred_region
          %p309 = scmp.lt.s32.totalorder %s19, 1
          %s310 = scalar_select %p309, %s19, 1
          %s311 = smul.addr %s310, 8
          %s312 = scalar_lea.vmem %s0, %s311
        $region56: #{selection_gnn_forward.1} parent=51 // pred_fallthru
          _
      $region52: #{selection_gnn_forward.1} parent=5 // pred_fallthru
        _
      %p313 = scmp.le.s32.totalorder 1, %s19
      %p314 = scmp.lt.s32.totalorder %s19, 3
      %p315 = pnand %p313, %p314
      %p316 = pneg %p315
      // Predicated region
      $region57: #{selection_gnn_forward.1} parent=5 // pred_check
        _
      $region58: #{selection_gnn_forward.1} parent=5 // pred_check_branch
        %318 = sbr.rel (%p315) target = $region60
      $region59: #{selection_gnn_forward.1} parent=5 // pred_region
        %s319 = ssub.s32 %s19, 1
        %p320 = scmp.lt.s32.totalorder %s24, 1
        %s321 = scalar_select %p320, %s24, 1
        %s322 = smul.addr %s321, 8
        %s323 = scalar_lea.vmem %s0, %s322
        %p324 = pneg %p45
        %p325 = pneg %p42
        %p326 = pneg %p66
        %p327 = pneg %p63
        %p328 = pneg %p87
        %p329 = pneg %p84
        %p330 = pneg %p108
        %p331 = pneg %p105
        %p332 = pneg %p129
        %p333 = pneg %p126
        %p334 = pneg %p150
        %p335 = pneg %p147
        %p336 = pneg %p171
        %p337 = pneg %p168
        %p338 = pneg %p192
        %p339 = pneg %p189
        %p340 = pneg %p213
        %p341 = pneg %p210
        %p342 = pneg %p234
        %p343 = pneg %p231
        %p344 = pneg %p260
        %p345 = pneg %p257
        %s346 = sand.u32 %s247, 1
        %s347 = scalar_lea.sflag [#allocation3], %s346
        %s348 = sand.u32 %s247, 1
        %s349 = smul.addr %s348, 2
        %s350 = scalar_lea.vmem [#allocation2], %s349
        %p351 = scmp.lt.s32.totalorder %s24, 1
        %s352 = scalar_select %p351, %s24, 1
        %s353 = smul.addr %s352, 8
        %s354 = scalar_lea.vmem %s0, %s353
        %v355 = vld [vmem:[%s1] sm:$0xff]
        %v356 = vld [vmem:[%s1 + $0x8] sm:$0xff]
        %v357 = vld [vmem:[%s354] sm:$0xff]
        %v358 = vld [vmem:[%s3] sm:$0xff]
        %v359 = vld [vmem:[%s3 + $0x8] sm:$0xff]
        %v360 = vld [vmem:[%s2] sm:$0xff]
        %v361 = vld [vmem:[%s2 + $0x8] sm:$0xff]
        %vm362 = vcmask 130048
        %v364 = vsel %vm362, %v357, 0
        %366 = vmatprep.subr.mxu0 0.0
        %367 = vmatpush1.msra.mxu0 0.0
        %368 = vmatprep.subr.mxu0 0.0
        %369 = vmatpush1.msra.mxu0 0.0
        %370 = vmatprep.subr.mxu0 0.0
        %371 = vmatpush1.msra.mxu0 0.0
        %372 = vmatprep.subr.mxu0 0.0
        %373 = vmatpush1.msra.mxu0 0.0
        %374 = vmatprep.subr.mxu0 0.0
        %375 = vmatpush1.msra.mxu0 0.0
        %376 = vmatprep.subr.mxu0 0.0
        %377 = vmatpush1.msra.mxu0 0.0
        %378 = vmatprep.subr.mxu0 0.0
        %379 = vmatpush1.msra.mxu0 0.0
        %380 = vmatprep.subr.mxu0 0.0
        %381 = vmatpush1.msra.mxu0 0.0
        %382 = vmatprep.subr.mxu0 0.0
        %383 = vmatpush1.msra.mxu0 0.0
        %384 = vmatprep.subr.mxu0 0.0
        %385 = vmatpush1.msra.mxu0 0.0
        %386 = vmatprep.subr.mxu0 0.0
        %387 = vmatpush1.msra.mxu0 0.0
        %388 = vmatprep.subr.mxu0 0.0
        %389 = vmatpush1.msra.mxu0 0.0
        %390 = vmatprep.subr.mxu0 0.0
        %391 = vmatpush1.msra.mxu0 0.0
        %392 = vmatprep.subr.mxu0 0.0
        %393 = vmatpush1.msra.mxu0 0.0
        %394 = vmatprep.subr.mxu0 0.0
        %395 = vmatpush1.msra.mxu0 %v356
        %396 = vmatprep.subr.mxu0 0.0
        %397 = vmatpush1.msra.mxu0 %v355
        %398 = vmatprep.subr.mxu0 0.0
        %399 = vmatpush2.msra.mxu0 0.0
        %400 = vmatprep.subr.mxu0 0.0
        %401 = vmatpush2.msra.mxu0 0.0
        %402 = vmatprep.subr.mxu0 0.0
        %403 = vmatpush2.msra.mxu0 0.0
        %404 = vmatprep.subr.mxu0 0.0
        %405 = vmatpush2.msra.mxu0 0.0
        %406 = vmatprep.subr.mxu0 0.0
        %407 = vmatpush2.msra.mxu0 0.0
        %408 = vmatprep.subr.mxu0 0.0
        %409 = vmatpush2.msra.mxu0 0.0
        %410 = vmatprep.subr.mxu0 0.0
        %411 = vmatpush2.msra.mxu0 0.0
        %412 = vmatprep.subr.mxu0 0.0
        %413 = vmatpush2.msra.mxu0 0.0
        %414 = vmatprep.subr.mxu0 0.0
        %415 = vmatpush2.msra.mxu0 0.0
        %416 = vmatprep.subr.mxu0 0.0
        %417 = vmatpush2.msra.mxu0 0.0
        %418 = vmatprep.subr.mxu0 0.0
        %419 = vmatpush2.msra.mxu0 0.0
        %420 = vmatprep.subr.mxu0 0.0
        %421 = vmatpush2.msra.mxu0 0.0
        %422 = vmatprep.subr.mxu0 0.0
        %423 = vmatpush2.msra.mxu0 0.0
        %424 = vmatprep.subr.mxu0 0.0
        %425 = vmatpush2.msra.mxu0 0.0
        %426 = vmatprep.subr.mxu0 0.0
        %427 = vmatpush2.msra.mxu0 0.0
        %428 = vmatprep.subr.mxu0 0.0
        %429 = vmatpush2.msra.mxu0 0.0
        %430 = vmatprep.mubr.f32.mxu0 0.0
        %431 = vmatmul.mubr.f32.gmra.mxu0 %v364
        %v432 = vpop.f32.mrf.mxu0
        %v433 = vadd.f32 0.0, %v432
        %v434 = vpop.f32.mrf.mxu0
        %435 = vdwg.mxu0
        %s436 = scalar_lea.vmem %s2, 16
        %v437 = vld [vmem:[%s436] sm:$0xff]
        %v438 = vld [vmem:[%s436 + $0x8] sm:$0xff]
        %vm439 = vcmask 64512
        %v441 = vsel %vm439, %v437, 0
        %v444 = vsel %vm439, %v438, 0
        %446 = vmatprep.subr.mxu0 0.0
        %447 = vmatpush1.msra.mxu0 0.0
        %448 = vmatprep.subr.mxu0 0.0
        %449 = vmatpush1.msra.mxu0 0.0
        %450 = vmatprep.subr.mxu0 0.0
        %451 = vmatpush1.msra.mxu0 0.0
        %452 = vmatprep.subr.mxu0 0.0
        %453 = vmatpush1.msra.mxu0 0.0
        %454 = vmatprep.subr.mxu0 0.0
        %455 = vmatpush1.msra.mxu0 0.0
        %456 = vmatprep.subr.mxu0 0.0
        %457 = vmatpush1.msra.mxu0 0.0
        %458 = vmatprep.subr.mxu0 0.0
        %459 = vmatpush1.msra.mxu0 0.0
        %460 = vmatprep.subr.mxu0 0.0
        %461 = vmatpush1.msra.mxu0 0.0
        %462 = vmatprep.subr.mxu0 0.0
        %463 = vmatpush1.msra.mxu0 0.0
        %464 = vmatprep.subr.mxu0 0.0
        %465 = vmatpush1.msra.mxu0 0.0
        %466 = vmatprep.subr.mxu0 0.0
        %467 = vmatpush1.msra.mxu0 0.0
        %468 = vmatprep.subr.mxu0 0.0
        %469 = vmatpush1.msra.mxu0 0.0
        %470 = vmatprep.subr.mxu0 0.0
        %471 = vmatpush1.msra.mxu0 0.0
        %472 = vmatprep.subr.mxu0 0.0
        %473 = vmatpush1.msra.mxu0 0.0
        %474 = vmatprep.subr.mxu0 0.0
        %475 = vmatpush1.msra.mxu0 0.0
        %476 = vmatprep.subr.mxu0 0.0
        %477 = vmatpush1.msra.mxu0 %v433
        %478 = vmatprep.subr.mxu0 0.0
        %479 = vmatpush2.msra.mxu0 0.0
        %480 = vmatprep.subr.mxu0 0.0
        %481 = vmatpush2.msra.mxu0 0.0
        %482 = vmatprep.subr.mxu0 0.0
        %483 = vmatpush2.msra.mxu0 0.0
        %484 = vmatprep.subr.mxu0 0.0
        %485 = vmatpush2.msra.mxu0 0.0
        %486 = vmatprep.subr.mxu0 0.0
        %487 = vmatpush2.msra.mxu0 0.0
        %488 = vmatprep.subr.mxu0 0.0
        %489 = vmatpush2.msra.mxu0 0.0
        %490 = vmatprep.subr.mxu0 0.0
        %491 = vmatpush2.msra.mxu0 0.0
        %492 = vmatprep.subr.mxu0 0.0
        %493 = vmatpush2.msra.mxu0 0.0
        %494 = vmatprep.subr.mxu0 0.0
        %495 = vmatpush2.msra.mxu0 0.0
        %496 = vmatprep.subr.mxu0 0.0
        %497 = vmatpush2.msra.mxu0 0.0
        %498 = vmatprep.subr.mxu0 0.0
        %499 = vmatpush2.msra.mxu0 0.0
        %500 = vmatprep.subr.mxu0 0.0
        %501 = vmatpush2.msra.mxu0 0.0
        %502 = vmatprep.subr.mxu0 0.0
        %503 = vmatpush2.msra.mxu0 0.0
        %504 = vmatprep.subr.mxu0 0.0
        %505 = vmatpush2.msra.mxu0 0.0
        %506 = vmatprep.subr.mxu0 0.0
        %507 = vmatpush2.msra.mxu0 0.0
        %508 = vmatprep.subr.mxu0 0.0
        %509 = vmatpush2.msra.mxu0 0.0
        %510 = vmatprep.mubr.f32.mxu0 0.0
        %511 = vmatmul.mubr.f32.gmra.mxu0 %v441
        %v512 = vpop.f32.mrf.mxu0
        %v513 = vadd.f32 0.0, %v512
        %v514 = vpop.f32.mrf.mxu0
        %515 = vmatprep.mubr.f32.mxu0 0.0
        %516 = vmatmul.mubr.f32.gmra.mxu0 %v444
        %v517 = vpop.f32.mrf.mxu0
        %v518 = vadd.f32 0.0, %v517
        %v519 = vpop.f32.mrf.mxu0
        %520 = vdwg.mxu0
        %v522 = vsel %vm439, %v360, 0
        %v525 = vsel %vm439, %v361, 0
        %527 = vmatprep.subr.mxu0 0.0
        %528 = vmatpush1.msra.mxu0 0.0
        %529 = vmatprep.subr.mxu0 0.0
        %530 = vmatpush1.msra.mxu0 0.0
        %531 = vmatprep.subr.mxu0 0.0
        %532 = vmatpush1.msra.mxu0 0.0
        %533 = vmatprep.subr.mxu0 0.0
        %534 = vmatpush1.msra.mxu0 0.0
        %535 = vmatprep.subr.mxu0 0.0
        %536 = vmatpush1.msra.mxu0 0.0
        %537 = vmatprep.subr.mxu0 0.0
        %538 = vmatpush1.msra.mxu0 0.0
        %539 = vmatprep.subr.mxu0 0.0
        %540 = vmatpush1.msra.mxu0 0.0
        %541 = vmatprep.subr.mxu0 0.0
        %542 = vmatpush1.msra.mxu0 0.0
        %543 = vmatprep.subr.mxu0 0.0
        %544 = vmatpush1.msra.mxu0 0.0
        %545 = vmatprep.subr.mxu0 0.0
        %546 = vmatpush1.msra.mxu0 0.0
        %547 = vmatprep.subr.mxu0 0.0
        %548 = vmatpush1.msra.mxu0 0.0
        %549 = vmatprep.subr.mxu0 0.0
        %550 = vmatpush1.msra.mxu0 0.0
        %551 = vmatprep.subr.mxu0 0.0
        %552 = vmatpush1.msra.mxu0 0.0
        %553 = vmatprep.subr.mxu0 0.0
        %554 = vmatpush1.msra.mxu0 0.0
        %555 = vmatprep.subr.mxu0 0.0
        %556 = vmatpush1.msra.mxu0 0.0
        %557 = vmatprep.subr.mxu0 0.0
        %558 = vmatpush1.msra.mxu0 %v357
        %559 = vmatprep.subr.mxu0 0.0
        %560 = vmatpush2.msra.mxu0 0.0
        %561 = vmatprep.subr.mxu0 0.0
        %562 = vmatpush2.msra.mxu0 0.0
        %563 = vmatprep.subr.mxu0 0.0
        %564 = vmatpush2.msra.mxu0 0.0
        %565 = vmatprep.subr.mxu0 0.0
        %566 = vmatpush2.msra.mxu0 0.0
        %567 = vmatprep.subr.mxu0 0.0
        %568 = vmatpush2.msra.mxu0 0.0
        %569 = vmatprep.subr.mxu0 0.0
        %570 = vmatpush2.msra.mxu0 0.0
        %571 = vmatprep.subr.mxu0 0.0
        %572 = vmatpush2.msra.mxu0 0.0
        %573 = vmatprep.subr.mxu0 0.0
        %574 = vmatpush2.msra.mxu0 0.0
        %575 = vmatprep.subr.mxu0 0.0
        %576 = vmatpush2.msra.mxu0 0.0
        %577 = vmatprep.subr.mxu0 0.0
        %578 = vmatpush2.msra.mxu0 0.0
        %579 = vmatprep.subr.mxu0 0.0
        %580 = vmatpush2.msra.mxu0 0.0
        %581 = vmatprep.subr.mxu0 0.0
        %582 = vmatpush2.msra.mxu0 0.0
        %583 = vmatprep.subr.mxu0 0.0
        %584 = vmatpush2.msra.mxu0 0.0
        %585 = vmatprep.subr.mxu0 0.0
        %586 = vmatpush2.msra.mxu0 0.0
        %587 = vmatprep.subr.mxu0 0.0
        %588 = vmatpush2.msra.mxu0 0.0
        %589 = vmatprep.subr.mxu0 0.0
        %590 = vmatpush2.msra.mxu0 0.0
        %591 = vmatprep.mubr.f32.mxu0 0.0
        %592 = vmatmul.mubr.f32.gmra.mxu0 %v522
        %v593 = vpop.f32.mrf.mxu0
        %v594 = vadd.f32 %v513, %v593
        %v595 = vpop.f32.mrf.mxu0
        %596 = vmatprep.mubr.f32.mxu0 0.0
        %597 = vmatmul.mubr.f32.gmra.mxu0 %v525
        %v598 = vpop.f32.mrf.mxu0
        %v599 = vadd.f32 %v518, %v598
        %v600 = vpop.f32.mrf.mxu0
        %601 = vdwg.mxu0
        %v603 = vsel %vm362, %v433, 0
        %605 = vmatprep.subr.mxu0 0.0
        %606 = vmatpush1.msra.mxu0 0.0
        %607 = vmatprep.subr.mxu0 0.0
        %608 = vmatpush1.msra.mxu0 0.0
        %609 = vmatprep.subr.mxu0 0.0
        %610 = vmatpush1.msra.mxu0 0.0
        %611 = vmatprep.subr.mxu0 0.0
        %612 = vmatpush1.msra.mxu0 0.0
        %613 = vmatprep.subr.mxu0 0.0
        %614 = vmatpush1.msra.mxu0 0.0
        %615 = vmatprep.subr.mxu0 0.0
        %616 = vmatpush1.msra.mxu0 0.0
        %617 = vmatprep.subr.mxu0 0.0
        %618 = vmatpush1.msra.mxu0 0.0
        %619 = vmatprep.subr.mxu0 0.0
        %620 = vmatpush1.msra.mxu0 0.0
        %621 = vmatprep.subr.mxu0 0.0
        %622 = vmatpush1.msra.mxu0 0.0
        %623 = vmatprep.subr.mxu0 0.0
        %624 = vmatpush1.msra.mxu0 0.0
        %625 = vmatprep.subr.mxu0 0.0
        %626 = vmatpush1.msra.mxu0 0.0
        %627 = vmatprep.subr.mxu0 0.0
        %628 = vmatpush1.msra.mxu0 0.0
        %629 = vmatprep.subr.mxu0 0.0
        %630 = vmatpush1.msra.mxu0 0.0
        %631 = vmatprep.subr.mxu0 0.0
        %632 = vmatpush1.msra.mxu0 0.0
        %633 = vmatprep.subr.mxu0 0.0
        %634 = vmatpush1.msra.mxu0 %v356
        %635 = vmatprep.subr.mxu0 0.0
        %636 = vmatpush1.msra.mxu0 %v355
        %637 = vmatprep.subr.mxu0 0.0
        %638 = vmatpush2.msra.mxu0 0.0
        %639 = vmatprep.subr.mxu0 0.0
        %640 = vmatpush2.msra.mxu0 0.0
        %641 = vmatprep.subr.mxu0 0.0
        %642 = vmatpush2.msra.mxu0 0.0
        %643 = vmatprep.subr.mxu0 0.0
        %644 = vmatpush2.msra.mxu0 0.0
        %645 = vmatprep.subr.mxu0 0.0
        %646 = vmatpush2.msra.mxu0 0.0
        %647 = vmatprep.subr.mxu0 0.0
        %648 = vmatpush2.msra.mxu0 0.0
        %649 = vmatprep.subr.mxu0 0.0
        %650 = vmatpush2.msra.mxu0 0.0
        %651 = vmatprep.subr.mxu0 0.0
        %652 = vmatpush2.msra.mxu0 0.0
        %653 = vmatprep.subr.mxu0 0.0
        %654 = vmatpush2.msra.mxu0 0.0
        %655 = vmatprep.subr.mxu0 0.0
        %656 = vmatpush2.msra.mxu0 0.0
        %657 = vmatprep.subr.mxu0 0.0
        %658 = vmatpush2.msra.mxu0 0.0
        %659 = vmatprep.subr.mxu0 0.0
        %660 = vmatpush2.msra.mxu0 0.0
        %661 = vmatprep.subr.mxu0 0.0
        %662 = vmatpush2.msra.mxu0 0.0
        %663 = vmatprep.subr.mxu0 0.0
        %664 = vmatpush2.msra.mxu0 0.0
        %665 = vmatprep.subr.mxu0 0.0
        %666 = vmatpush2.msra.mxu0 0.0
        %667 = vmatprep.subr.mxu0 0.0
        %668 = vmatpush2.msra.mxu0 0.0
        %669 = vmatprep.mubr.f32.mxu0 0.0
        %670 = vmatmul.mubr.f32.gmra.mxu0 %v603
        %v671 = vpop.f32.mrf.mxu0
        %v672 = vadd.f32 0.0, %v671
        %v673 = vpop.f32.mrf.mxu0
        %674 = vdwg.mxu0
        %s675 = scalar_lea.vmem %s2, 32
        %v676 = vld [vmem:[%s675] sm:$0xff]
        %v677 = vld [vmem:[%s675 + $0x8] sm:$0xff]
        %v679 = vsel %vm439, %v676, 0
        %v682 = vsel %vm439, %v677, 0
        %684 = vmatprep.subr.mxu0 0.0
        %685 = vmatpush1.msra.mxu0 0.0
        %686 = vmatprep.subr.mxu0 0.0
        %687 = vmatpush1.msra.mxu0 0.0
        %688 = vmatprep.subr.mxu0 0.0
        %689 = vmatpush1.msra.mxu0 0.0
        %690 = vmatprep.subr.mxu0 0.0
        %691 = vmatpush1.msra.mxu0 0.0
        %692 = vmatprep.subr.mxu0 0.0
        %693 = vmatpush1.msra.mxu0 0.0
        %694 = vmatprep.subr.mxu0 0.0
        %695 = vmatpush1.msra.mxu0 0.0
        %696 = vmatprep.subr.mxu0 0.0
        %697 = vmatpush1.msra.mxu0 0.0
        %698 = vmatprep.subr.mxu0 0.0
        %699 = vmatpush1.msra.mxu0 0.0
        %700 = vmatprep.subr.mxu0 0.0
        %701 = vmatpush1.msra.mxu0 0.0
        %702 = vmatprep.subr.mxu0 0.0
        %703 = vmatpush1.msra.mxu0 0.0
        %704 = vmatprep.subr.mxu0 0.0
        %705 = vmatpush1.msra.mxu0 0.0
        %706 = vmatprep.subr.mxu0 0.0
        %707 = vmatpush1.msra.mxu0 0.0
        %708 = vmatprep.subr.mxu0 0.0
        %709 = vmatpush1.msra.mxu0 0.0
        %710 = vmatprep.subr.mxu0 0.0
        %711 = vmatpush1.msra.mxu0 0.0
        %712 = vmatprep.subr.mxu0 0.0
        %713 = vmatpush1.msra.mxu0 0.0
        %714 = vmatprep.subr.mxu0 0.0
        %715 = vmatpush1.msra.mxu0 %v672
        %716 = vmatprep.subr.mxu0 0.0
        %717 = vmatpush2.msra.mxu0 0.0
        %718 = vmatprep.subr.mxu0 0.0
        %719 = vmatpush2.msra.mxu0 0.0
        %720 = vmatprep.subr.mxu0 0.0
        %721 = vmatpush2.msra.mxu0 0.0
        %722 = vmatprep.subr.mxu0 0.0
        %723 = vmatpush2.msra.mxu0 0.0
        %724 = vmatprep.subr.mxu0 0.0
        %725 = vmatpush2.msra.mxu0 0.0
        %726 = vmatprep.subr.mxu0 0.0
        %727 = vmatpush2.msra.mxu0 0.0
        %728 = vmatprep.subr.mxu0 0.0
        %729 = vmatpush2.msra.mxu0 0.0
        %730 = vmatprep.subr.mxu0 0.0
        %731 = vmatpush2.msra.mxu0 0.0
        %732 = vmatprep.subr.mxu0 0.0
        %733 = vmatpush2.msra.mxu0 0.0
        %734 = vmatprep.subr.mxu0 0.0
        %735 = vmatpush2.msra.mxu0 0.0
        %736 = vmatprep.subr.mxu0 0.0
        %737 = vmatpush2.msra.mxu0 0.0
        %738 = vmatprep.subr.mxu0 0.0
        %739 = vmatpush2.msra.mxu0 0.0
        %740 = vmatprep.subr.mxu0 0.0
        %741 = vmatpush2.msra.mxu0 0.0
        %742 = vmatprep.subr.mxu0 0.0
        %743 = vmatpush2.msra.mxu0 0.0
        %744 = vmatprep.subr.mxu0 0.0
        %745 = vmatpush2.msra.mxu0 0.0
        %746 = vmatprep.subr.mxu0 0.0
        %747 = vmatpush2.msra.mxu0 0.0
        %748 = vmatprep.mubr.f32.mxu0 0.0
        %749 = vmatmul.mubr.f32.gmra.mxu0 %v679
        %v750 = vpop.f32.mrf.mxu0
        %v751 = vadd.f32 0.0, %v750
        %v752 = vpop.f32.mrf.mxu0
        %753 = vmatprep.mubr.f32.mxu0 0.0
        %754 = vmatmul.mubr.f32.gmra.mxu0 %v682
        %v755 = vpop.f32.mrf.mxu0
        %v756 = vadd.f32 0.0, %v755
        %v757 = vpop.f32.mrf.mxu0
        %758 = vdwg.mxu0
        %v759 = vadd.f32 %v594, %v751
        %v760 = vadd.f32 %v599, %v756
        %762 = vset.pattern.permute.xlu0 0
        %763 = vperm.xlu0 %762, %v358
        %v764 = vpop.permute.xlu0 %763
        %767 = vset.pattern.permute.xlu0 0
        %768 = vperm.xlu0 %767, %v359
        %v769 = vpop.permute.xlu0 %768
        %v771 = vadd.f32 %v759, %v764
        %v772 = vadd.f32 %v760, %v769
        %v773 = vmax.f32 %v771, 0.0
        %v774 = vmax.f32 %v772, 0.0
        %v775 = vld [vmem:[%s5] sm:$0xff]
        %v776 = vld [vmem:[%s5 + $0x8] sm:$0xff]
        %v777 = vld [vmem:[%s5 + $0x10] sm:$0xff]
        %v778 = vld [vmem:[%s5 + $0x18] sm:$0xff]
        %v779 = vld [vmem:[%s4] sm:$0xff]
        %v780 = vld [vmem:[%s4 + $0x8] sm:$0xff]
        %v781 = vld [vmem:[%s4 + $0x10] sm:$0xff]
        %v782 = vld [vmem:[%s4 + $0x18] sm:$0xff]
        %v784 = vsel %vm362, %v773, 0
        %v787 = vsel %vm362, %v774, 0
        %789 = vmatprep.subr.mxu0 0.0
        %790 = vmatpush1.msra.mxu0 0.0
        %791 = vmatprep.subr.mxu0 0.0
        %792 = vmatpush1.msra.mxu0 0.0
        %793 = vmatprep.subr.mxu0 0.0
        %794 = vmatpush1.msra.mxu0 0.0
        %795 = vmatprep.subr.mxu0 0.0
        %796 = vmatpush1.msra.mxu0 0.0
        %797 = vmatprep.subr.mxu0 0.0
        %798 = vmatpush1.msra.mxu0 0.0
        %799 = vmatprep.subr.mxu0 0.0
        %800 = vmatpush1.msra.mxu0 0.0
        %801 = vmatprep.subr.mxu0 0.0
        %802 = vmatpush1.msra.mxu0 0.0
        %803 = vmatprep.subr.mxu0 0.0
        %804 = vmatpush1.msra.mxu0 0.0
        %805 = vmatprep.subr.mxu0 0.0
        %806 = vmatpush1.msra.mxu0 0.0
        %807 = vmatprep.subr.mxu0 0.0
        %808 = vmatpush1.msra.mxu0 0.0
        %809 = vmatprep.subr.mxu0 0.0
        %810 = vmatpush1.msra.mxu0 0.0
        %811 = vmatprep.subr.mxu0 0.0
        %812 = vmatpush1.msra.mxu0 0.0
        %813 = vmatprep.subr.mxu0 0.0
        %814 = vmatpush1.msra.mxu0 0.0
        %815 = vmatprep.subr.mxu0 0.0
        %816 = vmatpush1.msra.mxu0 0.0
        %817 = vmatprep.subr.mxu0 0.0
        %818 = vmatpush1.msra.mxu0 %v356
        %819 = vmatprep.subr.mxu0 0.0
        %820 = vmatpush1.msra.mxu0 %v355
        %821 = vmatprep.subr.mxu0 0.0
        %822 = vmatpush2.msra.mxu0 0.0
        %823 = vmatprep.subr.mxu0 0.0
        %824 = vmatpush2.msra.mxu0 0.0
        %825 = vmatprep.subr.mxu0 0.0
        %826 = vmatpush2.msra.mxu0 0.0
        %827 = vmatprep.subr.mxu0 0.0
        %828 = vmatpush2.msra.mxu0 0.0
        %829 = vmatprep.subr.mxu0 0.0
        %830 = vmatpush2.msra.mxu0 0.0
        %831 = vmatprep.subr.mxu0 0.0
        %832 = vmatpush2.msra.mxu0 0.0
        %833 = vmatprep.subr.mxu0 0.0
        %834 = vmatpush2.msra.mxu0 0.0
        %835 = vmatprep.subr.mxu0 0.0
        %836 = vmatpush2.msra.mxu0 0.0
        %837 = vmatprep.subr.mxu0 0.0
        %838 = vmatpush2.msra.mxu0 0.0
        %839 = vmatprep.subr.mxu0 0.0
        %840 = vmatpush2.msra.mxu0 0.0
        %841 = vmatprep.subr.mxu0 0.0
        %842 = vmatpush2.msra.mxu0 0.0
        %843 = vmatprep.subr.mxu0 0.0
        %844 = vmatpush2.msra.mxu0 0.0
        %845 = vmatprep.subr.mxu0 0.0
        %846 = vmatpush2.msra.mxu0 0.0
        %847 = vmatprep.subr.mxu0 0.0
        %848 = vmatpush2.msra.mxu0 0.0
        %849 = vmatprep.subr.mxu0 0.0
        %850 = vmatpush2.msra.mxu0 0.0
        %851 = vmatprep.subr.mxu0 0.0
        %852 = vmatpush2.msra.mxu0 0.0
        %853 = vmatprep.mubr.f32.mxu0 0.0
        %854 = vmatmul.mubr.f32.gmra.mxu0 %v784
        %v855 = vpop.f32.mrf.mxu0
        %v856 = vadd.f32 0.0, %v855
        %v857 = vpop.f32.mrf.mxu0
        %858 = vmatprep.mubr.f32.mxu0 0.0
        %859 = vmatmul.mubr.f32.gmra.mxu0 %v787
        %v860 = vpop.f32.mrf.mxu0
        %v861 = vadd.f32 0.0, %v860
        %v862 = vpop.f32.mrf.mxu0
        %863 = vdwg.mxu0
        %s864 = scalar_lea.vmem %s4, 32
        %v865 = vld [vmem:[%s864] sm:$0xff]
        %v866 = vld [vmem:[%s864 + $0x8] sm:$0xff]
        %v867 = vld [vmem:[%s864 + $0x10] sm:$0xff]
        %v868 = vld [vmem:[%s864 + $0x18] sm:$0xff]
        %v870 = vsel %vm362, %v865, 0
        %v873 = vsel %vm362, %v866, 0
        %v876 = vsel %vm362, %v867, 0
        %v879 = vsel %vm362, %v868, 0
        %881 = vmatprep.subr.mxu0 0.0
        %882 = vmatpush1.msra.mxu0 0.0
        %883 = vmatprep.subr.mxu0 0.0
        %884 = vmatpush1.msra.mxu0 0.0
        %885 = vmatprep.subr.mxu0 0.0
        %886 = vmatpush1.msra.mxu0 0.0
        %887 = vmatprep.subr.mxu0 0.0
        %888 = vmatpush1.msra.mxu0 0.0
        %889 = vmatprep.subr.mxu0 0.0
        %890 = vmatpush1.msra.mxu0 0.0
        %891 = vmatprep.subr.mxu0 0.0
        %892 = vmatpush1.msra.mxu0 0.0
        %893 = vmatprep.subr.mxu0 0.0
        %894 = vmatpush1.msra.mxu0 0.0
        %895 = vmatprep.subr.mxu0 0.0
        %896 = vmatpush1.msra.mxu0 0.0
        %897 = vmatprep.subr.mxu0 0.0
        %898 = vmatpush1.msra.mxu0 0.0
        %899 = vmatprep.subr.mxu0 0.0
        %900 = vmatpush1.msra.mxu0 0.0
        %901 = vmatprep.subr.mxu0 0.0
        %902 = vmatpush1.msra.mxu0 0.0
        %903 = vmatprep.subr.mxu0 0.0
        %904 = vmatpush1.msra.mxu0 0.0
        %905 = vmatprep.subr.mxu0 0.0
        %906 = vmatpush1.msra.mxu0 0.0
        %907 = vmatprep.subr.mxu0 0.0
        %908 = vmatpush1.msra.mxu0 0.0
        %909 = vmatprep.subr.mxu0 0.0
        %910 = vmatpush1.msra.mxu0 %v861
        %911 = vmatprep.subr.mxu0 0.0
        %912 = vmatpush1.msra.mxu0 %v856
        %913 = vmatprep.subr.mxu0 0.0
        %914 = vmatpush2.msra.mxu0 0.0
        %915 = vmatprep.subr.mxu0 0.0
        %916 = vmatpush2.msra.mxu0 0.0
        %917 = vmatprep.subr.mxu0 0.0
        %918 = vmatpush2.msra.mxu0 0.0
        %919 = vmatprep.subr.mxu0 0.0
        %920 = vmatpush2.msra.mxu0 0.0
        %921 = vmatprep.subr.mxu0 0.0
        %922 = vmatpush2.msra.mxu0 0.0
        %923 = vmatprep.subr.mxu0 0.0
        %924 = vmatpush2.msra.mxu0 0.0
        %925 = vmatprep.subr.mxu0 0.0
        %926 = vmatpush2.msra.mxu0 0.0
        %927 = vmatprep.subr.mxu0 0.0
        %928 = vmatpush2.msra.mxu0 0.0
        %929 = vmatprep.subr.mxu0 0.0
        %930 = vmatpush2.msra.mxu0 0.0
        %931 = vmatprep.subr.mxu0 0.0
        %932 = vmatpush2.msra.mxu0 0.0
        %933 = vmatprep.subr.mxu0 0.0
        %934 = vmatpush2.msra.mxu0 0.0
        %935 = vmatprep.subr.mxu0 0.0
        %936 = vmatpush2.msra.mxu0 0.0
        %937 = vmatprep.subr.mxu0 0.0
        %938 = vmatpush2.msra.mxu0 0.0
        %939 = vmatprep.subr.mxu0 0.0
        %940 = vmatpush2.msra.mxu0 0.0
        %941 = vmatprep.subr.mxu0 0.0
        %942 = vmatpush2.msra.mxu0 0.0
        %943 = vmatprep.subr.mxu0 0.0
        %944 = vmatpush2.msra.mxu0 0.0
        %945 = vmatprep.mubr.f32.mxu0 0.0
        %946 = vmatmul.mubr.f32.gmra.mxu0 %v870
        %v947 = vpop.f32.mrf.mxu0
        %v948 = vadd.f32 0.0, %v947
        %v949 = vpop.f32.mrf.mxu0
        %950 = vmatprep.mubr.f32.mxu0 0.0
        %951 = vmatmul.mubr.f32.gmra.mxu0 %v873
        %v952 = vpop.f32.mrf.mxu0
        %v953 = vadd.f32 0.0, %v952
        %v954 = vpop.f32.mrf.mxu0
        %955 = vmatprep.mubr.f32.mxu0 0.0
        %956 = vmatmul.mubr.f32.gmra.mxu0 %v876
        %v957 = vpop.f32.mrf.mxu0
        %v958 = vadd.f32 0.0, %v957
        %v959 = vpop.f32.mrf.mxu0
        %960 = vmatprep.mubr.f32.mxu0 0.0
        %961 = vmatmul.mubr.f32.gmra.mxu0 %v879
        %v962 = vpop.f32.mrf.mxu0
        %v963 = vadd.f32 0.0, %v962
        %v964 = vpop.f32.mrf.mxu0
        %965 = vdwg.mxu0
        %v967 = vsel %vm362, %v779, 0
        %v970 = vsel %vm362, %v780, 0
        %v973 = vsel %vm362, %v781, 0
        %v976 = vsel %vm362, %v782, 0
        %978 = vmatprep.subr.mxu0 0.0
        %979 = vmatpush1.msra.mxu0 0.0
        %980 = vmatprep.subr.mxu0 0.0
        %981 = vmatpush1.msra.mxu0 0.0
        %982 = vmatprep.subr.mxu0 0.0
        %983 = vmatpush1.msra.mxu0 0.0
        %984 = vmatprep.subr.mxu0 0.0
        %985 = vmatpush1.msra.mxu0 0.0
        %986 = vmatprep.subr.mxu0 0.0
        %987 = vmatpush1.msra.mxu0 0.0
        %988 = vmatprep.subr.mxu0 0.0
        %989 = vmatpush1.msra.mxu0 0.0
        %990 = vmatprep.subr.mxu0 0.0
        %991 = vmatpush1.msra.mxu0 0.0
        %992 = vmatprep.subr.mxu0 0.0
        %993 = vmatpush1.msra.mxu0 0.0
        %994 = vmatprep.subr.mxu0 0.0
        %995 = vmatpush1.msra.mxu0 0.0
        %996 = vmatprep.subr.mxu0 0.0
        %997 = vmatpush1.msra.mxu0 0.0
        %998 = vmatprep.subr.mxu0 0.0
        %999 = vmatpush1.msra.mxu0 0.0
        %1000 = vmatprep.subr.mxu0 0.0
        %1001 = vmatpush1.msra.mxu0 0.0
        %1002 = vmatprep.subr.mxu0 0.0
        %1003 = vmatpush1.msra.mxu0 0.0
        %1004 = vmatprep.subr.mxu0 0.0
        %1005 = vmatpush1.msra.mxu0 0.0
        %1006 = vmatprep.subr.mxu0 0.0
        %1007 = vmatpush1.msra.mxu0 %v774
        %1008 = vmatprep.subr.mxu0 0.0
        %1009 = vmatpush1.msra.mxu0 %v773
        %1010 = vmatprep.subr.mxu0 0.0
        %1011 = vmatpush2.msra.mxu0 0.0
        %1012 = vmatprep.subr.mxu0 0.0
        %1013 = vmatpush2.msra.mxu0 0.0
        %1014 = vmatprep.subr.mxu0 0.0
        %1015 = vmatpush2.msra.mxu0 0.0
        %1016 = vmatprep.subr.mxu0 0.0
        %1017 = vmatpush2.msra.mxu0 0.0
        %1018 = vmatprep.subr.mxu0 0.0
        %1019 = vmatpush2.msra.mxu0 0.0
        %1020 = vmatprep.subr.mxu0 0.0
        %1021 = vmatpush2.msra.mxu0 0.0
        %1022 = vmatprep.subr.mxu0 0.0
        %1023 = vmatpush2.msra.mxu0 0.0
        %1024 = vmatprep.subr.mxu0 0.0
        %1025 = vmatpush2.msra.mxu0 0.0
        %1026 = vmatprep.subr.mxu0 0.0
        %1027 = vmatpush2.msra.mxu0 0.0
        %1028 = vmatprep.subr.mxu0 0.0
        %1029 = vmatpush2.msra.mxu0 0.0
        %1030 = vmatprep.subr.mxu0 0.0
        %1031 = vmatpush2.msra.mxu0 0.0
        %1032 = vmatprep.subr.mxu0 0.0
        %1033 = vmatpush2.msra.mxu0 0.0
        %1034 = vmatprep.subr.mxu0 0.0
        %1035 = vmatpush2.msra.mxu0 0.0
        %1036 = vmatprep.subr.mxu0 0.0
        %1037 = vmatpush2.msra.mxu0 0.0
        %1038 = vmatprep.subr.mxu0 0.0
        %1039 = vmatpush2.msra.mxu0 0.0
        %1040 = vmatprep.subr.mxu0 0.0
        %1041 = vmatpush2.msra.mxu0 0.0
        %1042 = vmatprep.mubr.f32.mxu0 0.0
        %1043 = vmatmul.mubr.f32.gmra.mxu0 %v967
        %v1044 = vpop.f32.mrf.mxu0
        %v1045 = vadd.f32 %v948, %v1044
        %v1046 = vpop.f32.mrf.mxu0
        %1047 = vmatprep.mubr.f32.mxu0 0.0
        %1048 = vmatmul.mubr.f32.gmra.mxu0 %v970
        %v1049 = vpop.f32.mrf.mxu0
        %v1050 = vadd.f32 %v953, %v1049
        %v1051 = vpop.f32.mrf.mxu0
        %1052 = vmatprep.mubr.f32.mxu0 0.0
        %1053 = vmatmul.mubr.f32.gmra.mxu0 %v973
        %v1054 = vpop.f32.mrf.mxu0
        %v1055 = vadd.f32 %v958, %v1054
        %v1056 = vpop.f32.mrf.mxu0
        %1057 = vmatprep.mubr.f32.mxu0 0.0
        %1058 = vmatmul.mubr.f32.gmra.mxu0 %v976
        %v1059 = vpop.f32.mrf.mxu0
        %v1060 = vadd.f32 %v963, %v1059
        %v1061 = vpop.f32.mrf.mxu0
        %1062 = vdwg.mxu0
        %v1064 = vsel %vm362, %v856, 0
        %v1067 = vsel %vm362, %v861, 0
        %1069 = vmatprep.subr.mxu0 0.0
        %1070 = vmatpush1.msra.mxu0 0.0
        %1071 = vmatprep.subr.mxu0 0.0
        %1072 = vmatpush1.msra.mxu0 0.0
        %1073 = vmatprep.subr.mxu0 0.0
        %1074 = vmatpush1.msra.mxu0 0.0
        %1075 = vmatprep.subr.mxu0 0.0
        %1076 = vmatpush1.msra.mxu0 0.0
        %1077 = vmatprep.subr.mxu0 0.0
        %1078 = vmatpush1.msra.mxu0 0.0
        %1079 = vmatprep.subr.mxu0 0.0
        %1080 = vmatpush1.msra.mxu0 0.0
        %1081 = vmatprep.subr.mxu0 0.0
        %1082 = vmatpush1.msra.mxu0 0.0
        %1083 = vmatprep.subr.mxu0 0.0
        %1084 = vmatpush1.msra.mxu0 0.0
        %1085 = vmatprep.subr.mxu0 0.0
        %1086 = vmatpush1.msra.mxu0 0.0
        %1087 = vmatprep.subr.mxu0 0.0
        %1088 = vmatpush1.msra.mxu0 0.0
        %1089 = vmatprep.subr.mxu0 0.0
        %1090 = vmatpush1.msra.mxu0 0.0
        %1091 = vmatprep.subr.mxu0 0.0
        %1092 = vmatpush1.msra.mxu0 0.0
        %1093 = vmatprep.subr.mxu0 0.0
        %1094 = vmatpush1.msra.mxu0 0.0
        %1095 = vmatprep.subr.mxu0 0.0
        %1096 = vmatpush1.msra.mxu0 0.0
        %1097 = vmatprep.subr.mxu0 0.0
        %1098 = vmatpush1.msra.mxu0 %v356
        %1099 = vmatprep.subr.mxu0 0.0
        %1100 = vmatpush1.msra.mxu0 %v355
        %1101 = vmatprep.subr.mxu0 0.0
        %1102 = vmatpush2.msra.mxu0 0.0
        %1103 = vmatprep.subr.mxu0 0.0
        %1104 = vmatpush2.msra.mxu0 0.0
        %1105 = vmatprep.subr.mxu0 0.0
        %1106 = vmatpush2.msra.mxu0 0.0
        %1107 = vmatprep.subr.mxu0 0.0
        %1108 = vmatpush2.msra.mxu0 0.0
        %1109 = vmatprep.subr.mxu0 0.0
        %1110 = vmatpush2.msra.mxu0 0.0
        %1111 = vmatprep.subr.mxu0 0.0
        %1112 = vmatpush2.msra.mxu0 0.0
        %1113 = vmatprep.subr.mxu0 0.0
        %1114 = vmatpush2.msra.mxu0 0.0
        %1115 = vmatprep.subr.mxu0 0.0
        %1116 = vmatpush2.msra.mxu0 0.0
        %1117 = vmatprep.subr.mxu0 0.0
        %1118 = vmatpush2.msra.mxu0 0.0
        %1119 = vmatprep.subr.mxu0 0.0
        %1120 = vmatpush2.msra.mxu0 0.0
        %1121 = vmatprep.subr.mxu0 0.0
        %1122 = vmatpush2.msra.mxu0 0.0
        %1123 = vmatprep.subr.mxu0 0.0
        %1124 = vmatpush2.msra.mxu0 0.0
        %1125 = vmatprep.subr.mxu0 0.0
        %1126 = vmatpush2.msra.mxu0 0.0
        %1127 = vmatprep.subr.mxu0 0.0
        %1128 = vmatpush2.msra.mxu0 0.0
        %1129 = vmatprep.subr.mxu0 0.0
        %1130 = vmatpush2.msra.mxu0 0.0
        %1131 = vmatprep.subr.mxu0 0.0
        %1132 = vmatpush2.msra.mxu0 0.0
        %1133 = vmatprep.mubr.f32.mxu0 0.0
        %1134 = vmatmul.mubr.f32.gmra.mxu0 %v1064
        %v1135 = vpop.f32.mrf.mxu0
        %v1136 = vadd.f32 0.0, %v1135
        %v1137 = vpop.f32.mrf.mxu0
        %1138 = vmatprep.mubr.f32.mxu0 0.0
        %1139 = vmatmul.mubr.f32.gmra.mxu0 %v1067
        %v1140 = vpop.f32.mrf.mxu0
        %v1141 = vadd.f32 0.0, %v1140
        %v1142 = vpop.f32.mrf.mxu0
        %1143 = vdwg.mxu0
        %s1144 = scalar_lea.vmem %s4, 64
        %v1145 = vld [vmem:[%s1144] sm:$0xff]
        %v1146 = vld [vmem:[%s1144 + $0x8] sm:$0xff]
        %v1147 = vld [vmem:[%s1144 + $0x10] sm:$0xff]
        %v1148 = vld [vmem:[%s1144 + $0x18] sm:$0xff]
        %v1150 = vsel %vm362, %v1145, 0
        %v1153 = vsel %vm362, %v1146, 0
        %v1156 = vsel %vm362, %v1147, 0
        %v1159 = vsel %vm362, %v1148, 0
        %1161 = vmatprep.subr.mxu0 0.0
        %1162 = vmatpush1.msra.mxu0 0.0
        %1163 = vmatprep.subr.mxu0 0.0
        %1164 = vmatpush1.msra.mxu0 0.0
        %1165 = vmatprep.subr.mxu0 0.0
        %1166 = vmatpush1.msra.mxu0 0.0
        %1167 = vmatprep.subr.mxu0 0.0
        %1168 = vmatpush1.msra.mxu0 0.0
        %1169 = vmatprep.subr.mxu0 0.0
        %1170 = vmatpush1.msra.mxu0 0.0
        %1171 = vmatprep.subr.mxu0 0.0
        %1172 = vmatpush1.msra.mxu0 0.0
        %1173 = vmatprep.subr.mxu0 0.0
        %1174 = vmatpush1.msra.mxu0 0.0
        %1175 = vmatprep.subr.mxu0 0.0
        %1176 = vmatpush1.msra.mxu0 0.0
        %1177 = vmatprep.subr.mxu0 0.0
        %1178 = vmatpush1.msra.mxu0 0.0
        %1179 = vmatprep.subr.mxu0 0.0
        %1180 = vmatpush1.msra.mxu0 0.0
        %1181 = vmatprep.subr.mxu0 0.0
        %1182 = vmatpush1.msra.mxu0 0.0
        %1183 = vmatprep.subr.mxu0 0.0
        %1184 = vmatpush1.msra.mxu0 0.0
        %1185 = vmatprep.subr.mxu0 0.0
        %1186 = vmatpush1.msra.mxu0 0.0
        %1187 = vmatprep.subr.mxu0 0.0
        %1188 = vmatpush1.msra.mxu0 0.0
        %1189 = vmatprep.subr.mxu0 0.0
        %1190 = vmatpush1.msra.mxu0 %v1141
        %1191 = vmatprep.subr.mxu0 0.0
        %1192 = vmatpush1.msra.mxu0 %v1136
        %1193 = vmatprep.subr.mxu0 0.0
        %1194 = vmatpush2.msra.mxu0 0.0
        %1195 = vmatprep.subr.mxu0 0.0
        %1196 = vmatpush2.msra.mxu0 0.0
        %1197 = vmatprep.subr.mxu0 0.0
        %1198 = vmatpush2.msra.mxu0 0.0
        %1199 = vmatprep.subr.mxu0 0.0
        %1200 = vmatpush2.msra.mxu0 0.0
        %1201 = vmatprep.subr.mxu0 0.0
        %1202 = vmatpush2.msra.mxu0 0.0
        %1203 = vmatprep.subr.mxu0 0.0
        %1204 = vmatpush2.msra.mxu0 0.0
        %1205 = vmatprep.subr.mxu0 0.0
        %1206 = vmatpush2.msra.mxu0 0.0
        %1207 = vmatprep.subr.mxu0 0.0
        %1208 = vmatpush2.msra.mxu0 0.0
        %1209 = vmatprep.subr.mxu0 0.0
        %1210 = vmatpush2.msra.mxu0 0.0
        %1211 = vmatprep.subr.mxu0 0.0
        %1212 = vmatpush2.msra.mxu0 0.0
        %1213 = vmatprep.subr.mxu0 0.0
        %1214 = vmatpush2.msra.mxu0 0.0
        %1215 = vmatprep.subr.mxu0 0.0
        %1216 = vmatpush2.msra.mxu0 0.0
        %1217 = vmatprep.subr.mxu0 0.0
        %1218 = vmatpush2.msra.mxu0 0.0
        %1219 = vmatprep.subr.mxu0 0.0
        %1220 = vmatpush2.msra.mxu0 0.0
        %1221 = vmatprep.subr.mxu0 0.0
        %1222 = vmatpush2.msra.mxu0 0.0
        %1223 = vmatprep.subr.mxu0 0.0
        %1224 = vmatpush2.msra.mxu0 0.0
        %1225 = vmatprep.mubr.f32.mxu0 0.0
        %1226 = vmatmul.mubr.f32.gmra.mxu0 %v1150
        %v1227 = vpop.f32.mrf.mxu0
        %v1228 = vadd.f32 0.0, %v1227
        %v1229 = vpop.f32.mrf.mxu0
        %1230 = vmatprep.mubr.f32.mxu0 0.0
        %1231 = vmatmul.mubr.f32.gmra.mxu0 %v1153
        %v1232 = vpop.f32.mrf.mxu0
        %v1233 = vadd.f32 0.0, %v1232
        %v1234 = vpop.f32.mrf.mxu0
        %1235 = vmatprep.mubr.f32.mxu0 0.0
        %1236 = vmatmul.mubr.f32.gmra.mxu0 %v1156
        %v1237 = vpop.f32.mrf.mxu0
        %v1238 = vadd.f32 0.0, %v1237
        %v1239 = vpop.f32.mrf.mxu0
        %1240 = vmatprep.mubr.f32.mxu0 0.0
        %1241 = vmatmul.mubr.f32.gmra.mxu0 %v1159
        %v1242 = vpop.f32.mrf.mxu0
        %v1243 = vadd.f32 0.0, %v1242
        %v1244 = vpop.f32.mrf.mxu0
        %1245 = vdwg.mxu0
        %v1246 = vadd.f32 %v1045, %v1228
        %v1247 = vadd.f32 %v1050, %v1233
        %v1248 = vadd.f32 %v1055, %v1238
        %v1249 = vadd.f32 %v1060, %v1243
        %1251 = vset.pattern.permute.xlu0 0
        %1252 = vperm.xlu0 %1251, %v775
        %v1253 = vpop.permute.xlu0 %1252
        %1256 = vset.pattern.permute.xlu0 0
        %1257 = vperm.xlu0 %1256, %v776
        %v1258 = vpop.permute.xlu0 %1257
        %1261 = vset.pattern.permute.xlu0 0
        %1262 = vperm.xlu0 %1261, %v777
        %v1263 = vpop.permute.xlu0 %1262
        %1266 = vset.pattern.permute.xlu0 0
        %1267 = vperm.xlu0 %1266, %v778
        %v1268 = vpop.permute.xlu0 %1267
        %v1270 = vadd.f32 %v1246, %v1253
        %v1271 = vadd.f32 %v1247, %v1258
        %v1272 = vadd.f32 %v1248, %v1263
        %v1273 = vadd.f32 %v1249, %v1268
        %v1274 = vmax.f32 %v1270, 0.0
        %v1275 = vmax.f32 %v1271, 0.0
        %v1276 = vmax.f32 %v1272, 0.0
        %v1277 = vmax.f32 %v1273, 0.0
        %v1278 = vld [vmem:[%s7] sm:$0x1]
        %v1279 = vld [vmem:[%s6] sm:$0xff]
        %v1280 = vld [vmem:[%s6 + $0x8] sm:$0xff]
        %s1281 = scalar_lea.vmem %s6, 16
        %v1282 = vld [vmem:[%s1281] sm:$0xff]
        %v1283 = vld [vmem:[%s1281 + $0x8] sm:$0xff]
        %v1285 = vrot.slane %v1274, 2
        %v1286 = vsel %vm362, %v1285, 0
        %1288 = vmatprep.subr.mxu0 0.0
        %1289 = vmatpush1.msra.mxu0 0.0
        %1290 = vmatprep.subr.mxu0 0.0
        %1291 = vmatpush1.msra.mxu0 0.0
        %1292 = vmatprep.subr.mxu0 0.0
        %1293 = vmatpush1.msra.mxu0 0.0
        %1294 = vmatprep.subr.mxu0 0.0
        %1295 = vmatpush1.msra.mxu0 0.0
        %1296 = vmatprep.subr.mxu0 0.0
        %1297 = vmatpush1.msra.mxu0 0.0
        %1298 = vmatprep.subr.mxu0 0.0
        %1299 = vmatpush1.msra.mxu0 0.0
        %1300 = vmatprep.subr.mxu0 0.0
        %1301 = vmatpush1.msra.mxu0 0.0
        %1302 = vmatprep.subr.mxu0 0.0
        %1303 = vmatpush1.msra.mxu0 0.0
        %1304 = vmatprep.subr.mxu0 0.0
        %1305 = vmatpush1.msra.mxu0 0.0
        %1306 = vmatprep.subr.mxu0 0.0
        %1307 = vmatpush1.msra.mxu0 0.0
        %1308 = vmatprep.subr.mxu0 0.0
        %1309 = vmatpush1.msra.mxu0 0.0
        %1310 = vmatprep.subr.mxu0 0.0
        %1311 = vmatpush1.msra.mxu0 0.0
        %1312 = vmatprep.subr.mxu0 0.0
        %1313 = vmatpush1.msra.mxu0 0.0
        %1314 = vmatprep.subr.mxu0 0.0
        %1315 = vmatpush1.msra.mxu0 0.0
        %1316 = vmatprep.subr.mxu0 0.0
        %1317 = vmatpush1.msra.mxu0 %v1283
        %1318 = vmatprep.subr.mxu0 0.0
        %1319 = vmatpush1.msra.mxu0 %v1282
        %1320 = vmatprep.subr.mxu0 0.0
        %1321 = vmatpush2.msra.mxu0 0.0
        %1322 = vmatprep.subr.mxu0 0.0
        %1323 = vmatpush2.msra.mxu0 0.0
        %1324 = vmatprep.subr.mxu0 0.0
        %1325 = vmatpush2.msra.mxu0 0.0
        %1326 = vmatprep.subr.mxu0 0.0
        %1327 = vmatpush2.msra.mxu0 0.0
        %1328 = vmatprep.subr.mxu0 0.0
        %1329 = vmatpush2.msra.mxu0 0.0
        %1330 = vmatprep.subr.mxu0 0.0
        %1331 = vmatpush2.msra.mxu0 0.0
        %1332 = vmatprep.subr.mxu0 0.0
        %1333 = vmatpush2.msra.mxu0 0.0
        %1334 = vmatprep.subr.mxu0 0.0
        %1335 = vmatpush2.msra.mxu0 0.0
        %1336 = vmatprep.subr.mxu0 0.0
        %1337 = vmatpush2.msra.mxu0 0.0
        %1338 = vmatprep.subr.mxu0 0.0
        %1339 = vmatpush2.msra.mxu0 0.0
        %1340 = vmatprep.subr.mxu0 0.0
        %1341 = vmatpush2.msra.mxu0 0.0
        %1342 = vmatprep.subr.mxu0 0.0
        %1343 = vmatpush2.msra.mxu0 0.0
        %1344 = vmatprep.subr.mxu0 0.0
        %1345 = vmatpush2.msra.mxu0 0.0
        %1346 = vmatprep.subr.mxu0 0.0
        %1347 = vmatpush2.msra.mxu0 0.0
        %1348 = vmatprep.subr.mxu0 0.0
        %1349 = vmatpush2.msra.mxu0 0.0
        %1350 = vmatprep.subr.mxu0 0.0
        %1351 = vmatpush2.msra.mxu0 0.0
        %1352 = vmatprep.mubr.f32.mxu0 0.0
        %1353 = vmatmul.mubr.f32.gmra.mxu0 %v1286
        %v1354 = vpop.f32.mrf.mxu0
        %v1355 = vadd.f32 0.0, %v1354
        %v1356 = vpop.f32.mrf.mxu0
        %1357 = vdwg.mxu0
        %v1358 = vsel %vm362, %v1274, 0
        %1360 = vmatprep.subr.mxu0 0.0
        %1361 = vmatpush1.msra.mxu0 0.0
        %1362 = vmatprep.subr.mxu0 0.0
        %1363 = vmatpush1.msra.mxu0 0.0
        %1364 = vmatprep.subr.mxu0 0.0
        %1365 = vmatpush1.msra.mxu0 0.0
        %1366 = vmatprep.subr.mxu0 0.0
        %1367 = vmatpush1.msra.mxu0 0.0
        %1368 = vmatprep.subr.mxu0 0.0
        %1369 = vmatpush1.msra.mxu0 0.0
        %1370 = vmatprep.subr.mxu0 0.0
        %1371 = vmatpush1.msra.mxu0 0.0
        %1372 = vmatprep.subr.mxu0 0.0
        %1373 = vmatpush1.msra.mxu0 0.0
        %1374 = vmatprep.subr.mxu0 0.0
        %1375 = vmatpush1.msra.mxu0 0.0
        %1376 = vmatprep.subr.mxu0 0.0
        %1377 = vmatpush1.msra.mxu0 0.0
        %1378 = vmatprep.subr.mxu0 0.0
        %1379 = vmatpush1.msra.mxu0 0.0
        %1380 = vmatprep.subr.mxu0 0.0
        %1381 = vmatpush1.msra.mxu0 0.0
        %1382 = vmatprep.subr.mxu0 0.0
        %1383 = vmatpush1.msra.mxu0 0.0
        %1384 = vmatprep.subr.mxu0 0.0
        %1385 = vmatpush1.msra.mxu0 0.0
        %1386 = vmatprep.subr.mxu0 0.0
        %1387 = vmatpush1.msra.mxu0 0.0
        %1388 = vmatprep.subr.mxu0 0.0
        %1389 = vmatpush1.msra.mxu0 %v1280
        %1390 = vmatprep.subr.mxu0 0.0
        %1391 = vmatpush1.msra.mxu0 %v1279
        %1392 = vmatprep.subr.mxu0 0.0
        %1393 = vmatpush2.msra.mxu0 0.0
        %1394 = vmatprep.subr.mxu0 0.0
        %1395 = vmatpush2.msra.mxu0 0.0
        %1396 = vmatprep.subr.mxu0 0.0
        %1397 = vmatpush2.msra.mxu0 0.0
        %1398 = vmatprep.subr.mxu0 0.0
        %1399 = vmatpush2.msra.mxu0 0.0
        %1400 = vmatprep.subr.mxu0 0.0
        %1401 = vmatpush2.msra.mxu0 0.0
        %1402 = vmatprep.subr.mxu0 0.0
        %1403 = vmatpush2.msra.mxu0 0.0
        %1404 = vmatprep.subr.mxu0 0.0
        %1405 = vmatpush2.msra.mxu0 0.0
        %1406 = vmatprep.subr.mxu0 0.0
        %1407 = vmatpush2.msra.mxu0 0.0
        %1408 = vmatprep.subr.mxu0 0.0
        %1409 = vmatpush2.msra.mxu0 0.0
        %1410 = vmatprep.subr.mxu0 0.0
        %1411 = vmatpush2.msra.mxu0 0.0
        %1412 = vmatprep.subr.mxu0 0.0
        %1413 = vmatpush2.msra.mxu0 0.0
        %1414 = vmatprep.subr.mxu0 0.0
        %1415 = vmatpush2.msra.mxu0 0.0
        %1416 = vmatprep.subr.mxu0 0.0
        %1417 = vmatpush2.msra.mxu0 0.0
        %1418 = vmatprep.subr.mxu0 0.0
        %1419 = vmatpush2.msra.mxu0 0.0
        %1420 = vmatprep.subr.mxu0 0.0
        %1421 = vmatpush2.msra.mxu0 0.0
        %1422 = vmatprep.subr.mxu0 0.0
        %1423 = vmatpush2.msra.mxu0 0.0
        %1424 = vmatprep.mubr.f32.mxu0 0.0
        %1425 = vmatmul.mubr.f32.gmra.mxu0 %v1358
        %v1426 = vpop.f32.mrf.mxu0
        %v1427 = vadd.f32 %v1355, %v1426
        %v1428 = vpop.f32.mrf.mxu0
        %1429 = vdwg.mxu0
        %s1430 = scalar_lea.vmem %s6, 32
        %v1431 = vld [vmem:[%s1430] sm:$0xff]
        %v1432 = vld [vmem:[%s1430 + $0x8] sm:$0xff]
        %v1433 = vrot.slane %v1274, 4
        %v1434 = vsel %vm362, %v1433, 0
        %1436 = vmatprep.subr.mxu0 0.0
        %1437 = vmatpush1.msra.mxu0 0.0
        %1438 = vmatprep.subr.mxu0 0.0
        %1439 = vmatpush1.msra.mxu0 0.0
        %1440 = vmatprep.subr.mxu0 0.0
        %1441 = vmatpush1.msra.mxu0 0.0
        %1442 = vmatprep.subr.mxu0 0.0
        %1443 = vmatpush1.msra.mxu0 0.0
        %1444 = vmatprep.subr.mxu0 0.0
        %1445 = vmatpush1.msra.mxu0 0.0
        %1446 = vmatprep.subr.mxu0 0.0
        %1447 = vmatpush1.msra.mxu0 0.0
        %1448 = vmatprep.subr.mxu0 0.0
        %1449 = vmatpush1.msra.mxu0 0.0
        %1450 = vmatprep.subr.mxu0 0.0
        %1451 = vmatpush1.msra.mxu0 0.0
        %1452 = vmatprep.subr.mxu0 0.0
        %1453 = vmatpush1.msra.mxu0 0.0
        %1454 = vmatprep.subr.mxu0 0.0
        %1455 = vmatpush1.msra.mxu0 0.0
        %1456 = vmatprep.subr.mxu0 0.0
        %1457 = vmatpush1.msra.mxu0 0.0
        %1458 = vmatprep.subr.mxu0 0.0
        %1459 = vmatpush1.msra.mxu0 0.0
        %1460 = vmatprep.subr.mxu0 0.0
        %1461 = vmatpush1.msra.mxu0 0.0
        %1462 = vmatprep.subr.mxu0 0.0
        %1463 = vmatpush1.msra.mxu0 0.0
        %1464 = vmatprep.subr.mxu0 0.0
        %1465 = vmatpush1.msra.mxu0 %v1432
        %1466 = vmatprep.subr.mxu0 0.0
        %1467 = vmatpush1.msra.mxu0 %v1431
        %1468 = vmatprep.subr.mxu0 0.0
        %1469 = vmatpush2.msra.mxu0 0.0
        %1470 = vmatprep.subr.mxu0 0.0
        %1471 = vmatpush2.msra.mxu0 0.0
        %1472 = vmatprep.subr.mxu0 0.0
        %1473 = vmatpush2.msra.mxu0 0.0
        %1474 = vmatprep.subr.mxu0 0.0
        %1475 = vmatpush2.msra.mxu0 0.0
        %1476 = vmatprep.subr.mxu0 0.0
        %1477 = vmatpush2.msra.mxu0 0.0
        %1478 = vmatprep.subr.mxu0 0.0
        %1479 = vmatpush2.msra.mxu0 0.0
        %1480 = vmatprep.subr.mxu0 0.0
        %1481 = vmatpush2.msra.mxu0 0.0
        %1482 = vmatprep.subr.mxu0 0.0
        %1483 = vmatpush2.msra.mxu0 0.0
        %1484 = vmatprep.subr.mxu0 0.0
        %1485 = vmatpush2.msra.mxu0 0.0
        %1486 = vmatprep.subr.mxu0 0.0
        %1487 = vmatpush2.msra.mxu0 0.0
        %1488 = vmatprep.subr.mxu0 0.0
        %1489 = vmatpush2.msra.mxu0 0.0
        %1490 = vmatprep.subr.mxu0 0.0
        %1491 = vmatpush2.msra.mxu0 0.0
        %1492 = vmatprep.subr.mxu0 0.0
        %1493 = vmatpush2.msra.mxu0 0.0
        %1494 = vmatprep.subr.mxu0 0.0
        %1495 = vmatpush2.msra.mxu0 0.0
        %1496 = vmatprep.subr.mxu0 0.0
        %1497 = vmatpush2.msra.mxu0 0.0
        %1498 = vmatprep.subr.mxu0 0.0
        %1499 = vmatpush2.msra.mxu0 0.0
        %1500 = vmatprep.mubr.f32.mxu0 0.0
        %1501 = vmatmul.mubr.f32.gmra.mxu0 %v1434
        %v1502 = vpop.f32.mrf.mxu0
        %v1503 = vadd.f32 0.0, %v1502
        %v1504 = vpop.f32.mrf.mxu0
        %1505 = vdwg.mxu0
        %v1506 = vadd.f32 %v1427, %v1503
        %s1507 = scalar_lea.vmem %s6, 48
        %v1508 = vld [vmem:[%s1507] sm:$0xff]
        %v1509 = vld [vmem:[%s1507 + $0x8] sm:$0xff]
        %v1510 = vrot.slane %v1274, 6
        %v1511 = vsel %vm362, %v1510, 0
        %1513 = vmatprep.subr.mxu0 0.0
        %1514 = vmatpush1.msra.mxu0 0.0
        %1515 = vmatprep.subr.mxu0 0.0
        %1516 = vmatpush1.msra.mxu0 0.0
        %1517 = vmatprep.subr.mxu0 0.0
        %1518 = vmatpush1.msra.mxu0 0.0
        %1519 = vmatprep.subr.mxu0 0.0
        %1520 = vmatpush1.msra.mxu0 0.0
        %1521 = vmatprep.subr.mxu0 0.0
        %1522 = vmatpush1.msra.mxu0 0.0
        %1523 = vmatprep.subr.mxu0 0.0
        %1524 = vmatpush1.msra.mxu0 0.0
        %1525 = vmatprep.subr.mxu0 0.0
        %1526 = vmatpush1.msra.mxu0 0.0
        %1527 = vmatprep.subr.mxu0 0.0
        %1528 = vmatpush1.msra.mxu0 0.0
        %1529 = vmatprep.subr.mxu0 0.0
        %1530 = vmatpush1.msra.mxu0 0.0
        %1531 = vmatprep.subr.mxu0 0.0
        %1532 = vmatpush1.msra.mxu0 0.0
        %1533 = vmatprep.subr.mxu0 0.0
        %1534 = vmatpush1.msra.mxu0 0.0
        %1535 = vmatprep.subr.mxu0 0.0
        %1536 = vmatpush1.msra.mxu0 0.0
        %1537 = vmatprep.subr.mxu0 0.0
        %1538 = vmatpush1.msra.mxu0 0.0
        %1539 = vmatprep.subr.mxu0 0.0
        %1540 = vmatpush1.msra.mxu0 0.0
        %1541 = vmatprep.subr.mxu0 0.0
        %1542 = vmatpush1.msra.mxu0 %v1509
        %1543 = vmatprep.subr.mxu0 0.0
        %1544 = vmatpush1.msra.mxu0 %v1508
        %1545 = vmatprep.subr.mxu0 0.0
        %1546 = vmatpush2.msra.mxu0 0.0
        %1547 = vmatprep.subr.mxu0 0.0
        %1548 = vmatpush2.msra.mxu0 0.0
        %1549 = vmatprep.subr.mxu0 0.0
        %1550 = vmatpush2.msra.mxu0 0.0
        %1551 = vmatprep.subr.mxu0 0.0
        %1552 = vmatpush2.msra.mxu0 0.0
        %1553 = vmatprep.subr.mxu0 0.0
        %1554 = vmatpush2.msra.mxu0 0.0
        %1555 = vmatprep.subr.mxu0 0.0
        %1556 = vmatpush2.msra.mxu0 0.0
        %1557 = vmatprep.subr.mxu0 0.0
        %1558 = vmatpush2.msra.mxu0 0.0
        %1559 = vmatprep.subr.mxu0 0.0
        %1560 = vmatpush2.msra.mxu0 0.0
        %1561 = vmatprep.subr.mxu0 0.0
        %1562 = vmatpush2.msra.mxu0 0.0
        %1563 = vmatprep.subr.mxu0 0.0
        %1564 = vmatpush2.msra.mxu0 0.0
        %1565 = vmatprep.subr.mxu0 0.0
        %1566 = vmatpush2.msra.mxu0 0.0
        %1567 = vmatprep.subr.mxu0 0.0
        %1568 = vmatpush2.msra.mxu0 0.0
        %1569 = vmatprep.subr.mxu0 0.0
        %1570 = vmatpush2.msra.mxu0 0.0
        %1571 = vmatprep.subr.mxu0 0.0
        %1572 = vmatpush2.msra.mxu0 0.0
        %1573 = vmatprep.subr.mxu0 0.0
        %1574 = vmatpush2.msra.mxu0 0.0
        %1575 = vmatprep.subr.mxu0 0.0
        %1576 = vmatpush2.msra.mxu0 0.0
        %1577 = vmatprep.mubr.f32.mxu0 0.0
        %1578 = vmatmul.mubr.f32.gmra.mxu0 %v1511
        %v1579 = vpop.f32.mrf.mxu0
        %v1580 = vadd.f32 0.0, %v1579
        %v1581 = vpop.f32.mrf.mxu0
        %1582 = vdwg.mxu0
        %v1583 = vadd.f32 %v1506, %v1580
        %s1584 = scalar_lea.vmem %s6, 64
        %v1585 = vld [vmem:[%s1584] sm:$0xff]
        %v1586 = vld [vmem:[%s1584 + $0x8] sm:$0xff]
        %v1588 = vsel %vm362, %v1275, 0
        %1590 = vmatprep.subr.mxu0 0.0
        %1591 = vmatpush1.msra.mxu0 0.0
        %1592 = vmatprep.subr.mxu0 0.0
        %1593 = vmatpush1.msra.mxu0 0.0
        %1594 = vmatprep.subr.mxu0 0.0
        %1595 = vmatpush1.msra.mxu0 0.0
        %1596 = vmatprep.subr.mxu0 0.0
        %1597 = vmatpush1.msra.mxu0 0.0
        %1598 = vmatprep.subr.mxu0 0.0
        %1599 = vmatpush1.msra.mxu0 0.0
        %1600 = vmatprep.subr.mxu0 0.0
        %1601 = vmatpush1.msra.mxu0 0.0
        %1602 = vmatprep.subr.mxu0 0.0
        %1603 = vmatpush1.msra.mxu0 0.0
        %1604 = vmatprep.subr.mxu0 0.0
        %1605 = vmatpush1.msra.mxu0 0.0
        %1606 = vmatprep.subr.mxu0 0.0
        %1607 = vmatpush1.msra.mxu0 0.0
        %1608 = vmatprep.subr.mxu0 0.0
        %1609 = vmatpush1.msra.mxu0 0.0
        %1610 = vmatprep.subr.mxu0 0.0
        %1611 = vmatpush1.msra.mxu0 0.0
        %1612 = vmatprep.subr.mxu0 0.0
        %1613 = vmatpush1.msra.mxu0 0.0
        %1614 = vmatprep.subr.mxu0 0.0
        %1615 = vmatpush1.msra.mxu0 0.0
        %1616 = vmatprep.subr.mxu0 0.0
        %1617 = vmatpush1.msra.mxu0 0.0
        %1618 = vmatprep.subr.mxu0 0.0
        %1619 = vmatpush1.msra.mxu0 %v1586
        %1620 = vmatprep.subr.mxu0 0.0
        %1621 = vmatpush1.msra.mxu0 %v1585
        %1622 = vmatprep.subr.mxu0 0.0
        %1623 = vmatpush2.msra.mxu0 0.0
        %1624 = vmatprep.subr.mxu0 0.0
        %1625 = vmatpush2.msra.mxu0 0.0
        %1626 = vmatprep.subr.mxu0 0.0
        %1627 = vmatpush2.msra.mxu0 0.0
        %1628 = vmatprep.subr.mxu0 0.0
        %1629 = vmatpush2.msra.mxu0 0.0
        %1630 = vmatprep.subr.mxu0 0.0
        %1631 = vmatpush2.msra.mxu0 0.0
        %1632 = vmatprep.subr.mxu0 0.0
        %1633 = vmatpush2.msra.mxu0 0.0
        %1634 = vmatprep.subr.mxu0 0.0
        %1635 = vmatpush2.msra.mxu0 0.0
        %1636 = vmatprep.subr.mxu0 0.0
        %1637 = vmatpush2.msra.mxu0 0.0
        %1638 = vmatprep.subr.mxu0 0.0
        %1639 = vmatpush2.msra.mxu0 0.0
        %1640 = vmatprep.subr.mxu0 0.0
        %1641 = vmatpush2.msra.mxu0 0.0
        %1642 = vmatprep.subr.mxu0 0.0
        %1643 = vmatpush2.msra.mxu0 0.0
        %1644 = vmatprep.subr.mxu0 0.0
        %1645 = vmatpush2.msra.mxu0 0.0
        %1646 = vmatprep.subr.mxu0 0.0
        %1647 = vmatpush2.msra.mxu0 0.0
        %1648 = vmatprep.subr.mxu0 0.0
        %1649 = vmatpush2.msra.mxu0 0.0
        %1650 = vmatprep.subr.mxu0 0.0
        %1651 = vmatpush2.msra.mxu0 0.0
        %1652 = vmatprep.subr.mxu0 0.0
        %1653 = vmatpush2.msra.mxu0 0.0
        %1654 = vmatprep.mubr.f32.mxu0 0.0
        %1655 = vmatmul.mubr.f32.gmra.mxu0 %v1588
        %v1656 = vpop.f32.mrf.mxu0
        %v1657 = vadd.f32 0.0, %v1656
        %v1658 = vpop.f32.mrf.mxu0
        %1659 = vdwg.mxu0
        %v1660 = vadd.f32 %v1583, %v1657
        %s1661 = scalar_lea.vmem %s6, 80
        %v1662 = vld [vmem:[%s1661] sm:$0xff]
        %v1663 = vld [vmem:[%s1661 + $0x8] sm:$0xff]
        %v1664 = vrot.slane %v1275, 2
        %v1665 = vsel %vm362, %v1664, 0
        %1667 = vmatprep.subr.mxu0 0.0
        %1668 = vmatpush1.msra.mxu0 0.0
        %1669 = vmatprep.subr.mxu0 0.0
        %1670 = vmatpush1.msra.mxu0 0.0
        %1671 = vmatprep.subr.mxu0 0.0
        %1672 = vmatpush1.msra.mxu0 0.0
        %1673 = vmatprep.subr.mxu0 0.0
        %1674 = vmatpush1.msra.mxu0 0.0
        %1675 = vmatprep.subr.mxu0 0.0
        %1676 = vmatpush1.msra.mxu0 0.0
        %1677 = vmatprep.subr.mxu0 0.0
        %1678 = vmatpush1.msra.mxu0 0.0
        %1679 = vmatprep.subr.mxu0 0.0
        %1680 = vmatpush1.msra.mxu0 0.0
        %1681 = vmatprep.subr.mxu0 0.0
        %1682 = vmatpush1.msra.mxu0 0.0
        %1683 = vmatprep.subr.mxu0 0.0
        %1684 = vmatpush1.msra.mxu0 0.0
        %1685 = vmatprep.subr.mxu0 0.0
        %1686 = vmatpush1.msra.mxu0 0.0
        %1687 = vmatprep.subr.mxu0 0.0
        %1688 = vmatpush1.msra.mxu0 0.0
        %1689 = vmatprep.subr.mxu0 0.0
        %1690 = vmatpush1.msra.mxu0 0.0
        %1691 = vmatprep.subr.mxu0 0.0
        %1692 = vmatpush1.msra.mxu0 0.0
        %1693 = vmatprep.subr.mxu0 0.0
        %1694 = vmatpush1.msra.mxu0 0.0
        %1695 = vmatprep.subr.mxu0 0.0
        %1696 = vmatpush1.msra.mxu0 %v1663
        %1697 = vmatprep.subr.mxu0 0.0
        %1698 = vmatpush1.msra.mxu0 %v1662
        %1699 = vmatprep.subr.mxu0 0.0
        %1700 = vmatpush2.msra.mxu0 0.0
        %1701 = vmatprep.subr.mxu0 0.0
        %1702 = vmatpush2.msra.mxu0 0.0
        %1703 = vmatprep.subr.mxu0 0.0
        %1704 = vmatpush2.msra.mxu0 0.0
        %1705 = vmatprep.subr.mxu0 0.0
        %1706 = vmatpush2.msra.mxu0 0.0
        %1707 = vmatprep.subr.mxu0 0.0
        %1708 = vmatpush2.msra.mxu0 0.0
        %1709 = vmatprep.subr.mxu0 0.0
        %1710 = vmatpush2.msra.mxu0 0.0
        %1711 = vmatprep.subr.mxu0 0.0
        %1712 = vmatpush2.msra.mxu0 0.0
        %1713 = vmatprep.subr.mxu0 0.0
        %1714 = vmatpush2.msra.mxu0 0.0
        %1715 = vmatprep.subr.mxu0 0.0
        %1716 = vmatpush2.msra.mxu0 0.0
        %1717 = vmatprep.subr.mxu0 0.0
        %1718 = vmatpush2.msra.mxu0 0.0
        %1719 = vmatprep.subr.mxu0 0.0
        %1720 = vmatpush2.msra.mxu0 0.0
        %1721 = vmatprep.subr.mxu0 0.0
        %1722 = vmatpush2.msra.mxu0 0.0
        %1723 = vmatprep.subr.mxu0 0.0
        %1724 = vmatpush2.msra.mxu0 0.0
        %1725 = vmatprep.subr.mxu0 0.0
        %1726 = vmatpush2.msra.mxu0 0.0
        %1727 = vmatprep.subr.mxu0 0.0
        %1728 = vmatpush2.msra.mxu0 0.0
        %1729 = vmatprep.subr.mxu0 0.0
        %1730 = vmatpush2.msra.mxu0 0.0
        %1731 = vmatprep.mubr.f32.mxu0 0.0
        %1732 = vmatmul.mubr.f32.gmra.mxu0 %v1665
        %v1733 = vpop.f32.mrf.mxu0
        %v1734 = vadd.f32 0.0, %v1733
        %v1735 = vpop.f32.mrf.mxu0
        %1736 = vdwg.mxu0
        %v1737 = vadd.f32 %v1660, %v1734
        %s1738 = scalar_lea.vmem %s6, 96
        %v1739 = vld [vmem:[%s1738] sm:$0xff]
        %v1740 = vld [vmem:[%s1738 + $0x8] sm:$0xff]
        %v1741 = vrot.slane %v1275, 4
        %v1742 = vsel %vm362, %v1741, 0
        %1744 = vmatprep.subr.mxu0 0.0
        %1745 = vmatpush1.msra.mxu0 0.0
        %1746 = vmatprep.subr.mxu0 0.0
        %1747 = vmatpush1.msra.mxu0 0.0
        %1748 = vmatprep.subr.mxu0 0.0
        %1749 = vmatpush1.msra.mxu0 0.0
        %1750 = vmatprep.subr.mxu0 0.0
        %1751 = vmatpush1.msra.mxu0 0.0
        %1752 = vmatprep.subr.mxu0 0.0
        %1753 = vmatpush1.msra.mxu0 0.0
        %1754 = vmatprep.subr.mxu0 0.0
        %1755 = vmatpush1.msra.mxu0 0.0
        %1756 = vmatprep.subr.mxu0 0.0
        %1757 = vmatpush1.msra.mxu0 0.0
        %1758 = vmatprep.subr.mxu0 0.0
        %1759 = vmatpush1.msra.mxu0 0.0
        %1760 = vmatprep.subr.mxu0 0.0
        %1761 = vmatpush1.msra.mxu0 0.0
        %1762 = vmatprep.subr.mxu0 0.0
        %1763 = vmatpush1.msra.mxu0 0.0
        %1764 = vmatprep.subr.mxu0 0.0
        %1765 = vmatpush1.msra.mxu0 0.0
        %1766 = vmatprep.subr.mxu0 0.0
        %1767 = vmatpush1.msra.mxu0 0.0
        %1768 = vmatprep.subr.mxu0 0.0
        %1769 = vmatpush1.msra.mxu0 0.0
        %1770 = vmatprep.subr.mxu0 0.0
        %1771 = vmatpush1.msra.mxu0 0.0
        %1772 = vmatprep.subr.mxu0 0.0
        %1773 = vmatpush1.msra.mxu0 %v1740
        %1774 = vmatprep.subr.mxu0 0.0
        %1775 = vmatpush1.msra.mxu0 %v1739
        %1776 = vmatprep.subr.mxu0 0.0
        %1777 = vmatpush2.msra.mxu0 0.0
        %1778 = vmatprep.subr.mxu0 0.0
        %1779 = vmatpush2.msra.mxu0 0.0
        %1780 = vmatprep.subr.mxu0 0.0
        %1781 = vmatpush2.msra.mxu0 0.0
        %1782 = vmatprep.subr.mxu0 0.0
        %1783 = vmatpush2.msra.mxu0 0.0
        %1784 = vmatprep.subr.mxu0 0.0
        %1785 = vmatpush2.msra.mxu0 0.0
        %1786 = vmatprep.subr.mxu0 0.0
        %1787 = vmatpush2.msra.mxu0 0.0
        %1788 = vmatprep.subr.mxu0 0.0
        %1789 = vmatpush2.msra.mxu0 0.0
        %1790 = vmatprep.subr.mxu0 0.0
        %1791 = vmatpush2.msra.mxu0 0.0
        %1792 = vmatprep.subr.mxu0 0.0
        %1793 = vmatpush2.msra.mxu0 0.0
        %1794 = vmatprep.subr.mxu0 0.0
        %1795 = vmatpush2.msra.mxu0 0.0
        %1796 = vmatprep.subr.mxu0 0.0
        %1797 = vmatpush2.msra.mxu0 0.0
        %1798 = vmatprep.subr.mxu0 0.0
        %1799 = vmatpush2.msra.mxu0 0.0
        %1800 = vmatprep.subr.mxu0 0.0
        %1801 = vmatpush2.msra.mxu0 0.0
        %1802 = vmatprep.subr.mxu0 0.0
        %1803 = vmatpush2.msra.mxu0 0.0
        %1804 = vmatprep.subr.mxu0 0.0
        %1805 = vmatpush2.msra.mxu0 0.0
        %1806 = vmatprep.subr.mxu0 0.0
        %1807 = vmatpush2.msra.mxu0 0.0
        %1808 = vmatprep.mubr.f32.mxu0 0.0
        %1809 = vmatmul.mubr.f32.gmra.mxu0 %v1742
        %v1810 = vpop.f32.mrf.mxu0
        %v1811 = vadd.f32 0.0, %v1810
        %v1812 = vpop.f32.mrf.mxu0
        %1813 = vdwg.mxu0
        %v1814 = vadd.f32 %v1737, %v1811
        %s1815 = scalar_lea.vmem %s6, 112
        %v1816 = vld [vmem:[%s1815] sm:$0xff]
        %v1817 = vld [vmem:[%s1815 + $0x8] sm:$0xff]
        %v1818 = vrot.slane %v1275, 6
        %v1819 = vsel %vm362, %v1818, 0
        %1821 = vmatprep.subr.mxu0 0.0
        %1822 = vmatpush1.msra.mxu0 0.0
        %1823 = vmatprep.subr.mxu0 0.0
        %1824 = vmatpush1.msra.mxu0 0.0
        %1825 = vmatprep.subr.mxu0 0.0
        %1826 = vmatpush1.msra.mxu0 0.0
        %1827 = vmatprep.subr.mxu0 0.0
        %1828 = vmatpush1.msra.mxu0 0.0
        %1829 = vmatprep.subr.mxu0 0.0
        %1830 = vmatpush1.msra.mxu0 0.0
        %1831 = vmatprep.subr.mxu0 0.0
        %1832 = vmatpush1.msra.mxu0 0.0
        %1833 = vmatprep.subr.mxu0 0.0
        %1834 = vmatpush1.msra.mxu0 0.0
        %1835 = vmatprep.subr.mxu0 0.0
        %1836 = vmatpush1.msra.mxu0 0.0
        %1837 = vmatprep.subr.mxu0 0.0
        %1838 = vmatpush1.msra.mxu0 0.0
        %1839 = vmatprep.subr.mxu0 0.0
        %1840 = vmatpush1.msra.mxu0 0.0
        %1841 = vmatprep.subr.mxu0 0.0
        %1842 = vmatpush1.msra.mxu0 0.0
        %1843 = vmatprep.subr.mxu0 0.0
        %1844 = vmatpush1.msra.mxu0 0.0
        %1845 = vmatprep.subr.mxu0 0.0
        %1846 = vmatpush1.msra.mxu0 0.0
        %1847 = vmatprep.subr.mxu0 0.0
        %1848 = vmatpush1.msra.mxu0 0.0
        %1849 = vmatprep.subr.mxu0 0.0
        %1850 = vmatpush1.msra.mxu0 %v1817
        %1851 = vmatprep.subr.mxu0 0.0
        %1852 = vmatpush1.msra.mxu0 %v1816
        %1853 = vmatprep.subr.mxu0 0.0
        %1854 = vmatpush2.msra.mxu0 0.0
        %1855 = vmatprep.subr.mxu0 0.0
        %1856 = vmatpush2.msra.mxu0 0.0
        %1857 = vmatprep.subr.mxu0 0.0
        %1858 = vmatpush2.msra.mxu0 0.0
        %1859 = vmatprep.subr.mxu0 0.0
        %1860 = vmatpush2.msra.mxu0 0.0
        %1861 = vmatprep.subr.mxu0 0.0
        %1862 = vmatpush2.msra.mxu0 0.0
        %1863 = vmatprep.subr.mxu0 0.0
        %1864 = vmatpush2.msra.mxu0 0.0
        %1865 = vmatprep.subr.mxu0 0.0
        %1866 = vmatpush2.msra.mxu0 0.0
        %1867 = vmatprep.subr.mxu0 0.0
        %1868 = vmatpush2.msra.mxu0 0.0
        %1869 = vmatprep.subr.mxu0 0.0
        %1870 = vmatpush2.msra.mxu0 0.0
        %1871 = vmatprep.subr.mxu0 0.0
        %1872 = vmatpush2.msra.mxu0 0.0
        %1873 = vmatprep.subr.mxu0 0.0
        %1874 = vmatpush2.msra.mxu0 0.0
        %1875 = vmatprep.subr.mxu0 0.0
        %1876 = vmatpush2.msra.mxu0 0.0
        %1877 = vmatprep.subr.mxu0 0.0
        %1878 = vmatpush2.msra.mxu0 0.0
        %1879 = vmatprep.subr.mxu0 0.0
        %1880 = vmatpush2.msra.mxu0 0.0
        %1881 = vmatprep.subr.mxu0 0.0
        %1882 = vmatpush2.msra.mxu0 0.0
        %1883 = vmatprep.subr.mxu0 0.0
        %1884 = vmatpush2.msra.mxu0 0.0
        %1885 = vmatprep.mubr.f32.mxu0 0.0
        %1886 = vmatmul.mubr.f32.gmra.mxu0 %v1819
        %v1887 = vpop.f32.mrf.mxu0
        %v1888 = vadd.f32 0.0, %v1887
        %v1889 = vpop.f32.mrf.mxu0
        %1890 = vdwg.mxu0
        %v1891 = vadd.f32 %v1814, %v1888
        %s1892 = scalar_lea.vmem %s6, 128
        %v1893 = vld [vmem:[%s1892] sm:$0xff]
        %v1894 = vld [vmem:[%s1892 + $0x8] sm:$0xff]
        %v1896 = vsel %vm362, %v1276, 0
        %1898 = vmatprep.subr.mxu0 0.0
        %1899 = vmatpush1.msra.mxu0 0.0
        %1900 = vmatprep.subr.mxu0 0.0
        %1901 = vmatpush1.msra.mxu0 0.0
        %1902 = vmatprep.subr.mxu0 0.0
        %1903 = vmatpush1.msra.mxu0 0.0
        %1904 = vmatprep.subr.mxu0 0.0
        %1905 = vmatpush1.msra.mxu0 0.0
        %1906 = vmatprep.subr.mxu0 0.0
        %1907 = vmatpush1.msra.mxu0 0.0
        %1908 = vmatprep.subr.mxu0 0.0
        %1909 = vmatpush1.msra.mxu0 0.0
        %1910 = vmatprep.subr.mxu0 0.0
        %1911 = vmatpush1.msra.mxu0 0.0
        %1912 = vmatprep.subr.mxu0 0.0
        %1913 = vmatpush1.msra.mxu0 0.0
        %1914 = vmatprep.subr.mxu0 0.0
        %1915 = vmatpush1.msra.mxu0 0.0
        %1916 = vmatprep.subr.mxu0 0.0
        %1917 = vmatpush1.msra.mxu0 0.0
        %1918 = vmatprep.subr.mxu0 0.0
        %1919 = vmatpush1.msra.mxu0 0.0
        %1920 = vmatprep.subr.mxu0 0.0
        %1921 = vmatpush1.msra.mxu0 0.0
        %1922 = vmatprep.subr.mxu0 0.0
        %1923 = vmatpush1.msra.mxu0 0.0
        %1924 = vmatprep.subr.mxu0 0.0
        %1925 = vmatpush1.msra.mxu0 0.0
        %1926 = vmatprep.subr.mxu0 0.0
        %1927 = vmatpush1.msra.mxu0 %v1894
        %1928 = vmatprep.subr.mxu0 0.0
        %1929 = vmatpush1.msra.mxu0 %v1893
        %1930 = vmatprep.subr.mxu0 0.0
        %1931 = vmatpush2.msra.mxu0 0.0
        %1932 = vmatprep.subr.mxu0 0.0
        %1933 = vmatpush2.msra.mxu0 0.0
        %1934 = vmatprep.subr.mxu0 0.0
        %1935 = vmatpush2.msra.mxu0 0.0
        %1936 = vmatprep.subr.mxu0 0.0
        %1937 = vmatpush2.msra.mxu0 0.0
        %1938 = vmatprep.subr.mxu0 0.0
        %1939 = vmatpush2.msra.mxu0 0.0
        %1940 = vmatprep.subr.mxu0 0.0
        %1941 = vmatpush2.msra.mxu0 0.0
        %1942 = vmatprep.subr.mxu0 0.0
        %1943 = vmatpush2.msra.mxu0 0.0
        %1944 = vmatprep.subr.mxu0 0.0
        %1945 = vmatpush2.msra.mxu0 0.0
        %1946 = vmatprep.subr.mxu0 0.0
        %1947 = vmatpush2.msra.mxu0 0.0
        %1948 = vmatprep.subr.mxu0 0.0
        %1949 = vmatpush2.msra.mxu0 0.0
        %1950 = vmatprep.subr.mxu0 0.0
        %1951 = vmatpush2.msra.mxu0 0.0
        %1952 = vmatprep.subr.mxu0 0.0
        %1953 = vmatpush2.msra.mxu0 0.0
        %1954 = vmatprep.subr.mxu0 0.0
        %1955 = vmatpush2.msra.mxu0 0.0
        %1956 = vmatprep.subr.mxu0 0.0
        %1957 = vmatpush2.msra.mxu0 0.0
        %1958 = vmatprep.subr.mxu0 0.0
        %1959 = vmatpush2.msra.mxu0 0.0
        %1960 = vmatprep.subr.mxu0 0.0
        %1961 = vmatpush2.msra.mxu0 0.0
        %1962 = vmatprep.mubr.f32.mxu0 0.0
        %1963 = vmatmul.mubr.f32.gmra.mxu0 %v1896
        %v1964 = vpop.f32.mrf.mxu0
        %v1965 = vadd.f32 0.0, %v1964
        %v1966 = vpop.f32.mrf.mxu0
        %1967 = vdwg.mxu0
        %v1968 = vadd.f32 %v1891, %v1965
        %s1969 = scalar_lea.vmem %s6, 144
        %v1970 = vld [vmem:[%s1969] sm:$0xff]
        %v1971 = vld [vmem:[%s1969 + $0x8] sm:$0xff]
        %v1972 = vrot.slane %v1276, 2
        %v1973 = vsel %vm362, %v1972, 0
        %1975 = vmatprep.subr.mxu0 0.0
        %1976 = vmatpush1.msra.mxu0 0.0
        %1977 = vmatprep.subr.mxu0 0.0
        %1978 = vmatpush1.msra.mxu0 0.0
        %1979 = vmatprep.subr.mxu0 0.0
        %1980 = vmatpush1.msra.mxu0 0.0
        %1981 = vmatprep.subr.mxu0 0.0
        %1982 = vmatpush1.msra.mxu0 0.0
        %1983 = vmatprep.subr.mxu0 0.0
        %1984 = vmatpush1.msra.mxu0 0.0
        %1985 = vmatprep.subr.mxu0 0.0
        %1986 = vmatpush1.msra.mxu0 0.0
        %1987 = vmatprep.subr.mxu0 0.0
        %1988 = vmatpush1.msra.mxu0 0.0
        %1989 = vmatprep.subr.mxu0 0.0
        %1990 = vmatpush1.msra.mxu0 0.0
        %1991 = vmatprep.subr.mxu0 0.0
        %1992 = vmatpush1.msra.mxu0 0.0
        %1993 = vmatprep.subr.mxu0 0.0
        %1994 = vmatpush1.msra.mxu0 0.0
        %1995 = vmatprep.subr.mxu0 0.0
        %1996 = vmatpush1.msra.mxu0 0.0
        %1997 = vmatprep.subr.mxu0 0.0
        %1998 = vmatpush1.msra.mxu0 0.0
        %1999 = vmatprep.subr.mxu0 0.0
        %2000 = vmatpush1.msra.mxu0 0.0
        %2001 = vmatprep.subr.mxu0 0.0
        %2002 = vmatpush1.msra.mxu0 0.0
        %2003 = vmatprep.subr.mxu0 0.0
        %2004 = vmatpush1.msra.mxu0 %v1971
        %2005 = vmatprep.subr.mxu0 0.0
        %2006 = vmatpush1.msra.mxu0 %v1970
        %2007 = vmatprep.subr.mxu0 0.0
        %2008 = vmatpush2.msra.mxu0 0.0
        %2009 = vmatprep.subr.mxu0 0.0
        %2010 = vmatpush2.msra.mxu0 0.0
        %2011 = vmatprep.subr.mxu0 0.0
        %2012 = vmatpush2.msra.mxu0 0.0
        %2013 = vmatprep.subr.mxu0 0.0
        %2014 = vmatpush2.msra.mxu0 0.0
        %2015 = vmatprep.subr.mxu0 0.0
        %2016 = vmatpush2.msra.mxu0 0.0
        %2017 = vmatprep.subr.mxu0 0.0
        %2018 = vmatpush2.msra.mxu0 0.0
        %2019 = vmatprep.subr.mxu0 0.0
        %2020 = vmatpush2.msra.mxu0 0.0
        %2021 = vmatprep.subr.mxu0 0.0
        %2022 = vmatpush2.msra.mxu0 0.0
        %2023 = vmatprep.subr.mxu0 0.0
        %2024 = vmatpush2.msra.mxu0 0.0
        %2025 = vmatprep.subr.mxu0 0.0
        %2026 = vmatpush2.msra.mxu0 0.0
        %2027 = vmatprep.subr.mxu0 0.0
        %2028 = vmatpush2.msra.mxu0 0.0
        %2029 = vmatprep.subr.mxu0 0.0
        %2030 = vmatpush2.msra.mxu0 0.0
        %2031 = vmatprep.subr.mxu0 0.0
        %2032 = vmatpush2.msra.mxu0 0.0
        %2033 = vmatprep.subr.mxu0 0.0
        %2034 = vmatpush2.msra.mxu0 0.0
        %2035 = vmatprep.subr.mxu0 0.0
        %2036 = vmatpush2.msra.mxu0 0.0
        %2037 = vmatprep.subr.mxu0 0.0
        %2038 = vmatpush2.msra.mxu0 0.0
        %2039 = vmatprep.mubr.f32.mxu0 0.0
        %2040 = vmatmul.mubr.f32.gmra.mxu0 %v1973
        %v2041 = vpop.f32.mrf.mxu0
        %v2042 = vadd.f32 0.0, %v2041
        %v2043 = vpop.f32.mrf.mxu0
        %2044 = vdwg.mxu0
        %v2045 = vadd.f32 %v1968, %v2042
        %s2046 = scalar_lea.vmem %s6, 160
        %v2047 = vld [vmem:[%s2046] sm:$0xff]
        %v2048 = vld [vmem:[%s2046 + $0x8] sm:$0xff]
        %v2049 = vrot.slane %v1276, 4
        %v2050 = vsel %vm362, %v2049, 0
        %2052 = vmatprep.subr.mxu0 0.0
        %2053 = vmatpush1.msra.mxu0 0.0
        %2054 = vmatprep.subr.mxu0 0.0
        %2055 = vmatpush1.msra.mxu0 0.0
        %2056 = vmatprep.subr.mxu0 0.0
        %2057 = vmatpush1.msra.mxu0 0.0
        %2058 = vmatprep.subr.mxu0 0.0
        %2059 = vmatpush1.msra.mxu0 0.0
        %2060 = vmatprep.subr.mxu0 0.0
        %2061 = vmatpush1.msra.mxu0 0.0
        %2062 = vmatprep.subr.mxu0 0.0
        %2063 = vmatpush1.msra.mxu0 0.0
        %2064 = vmatprep.subr.mxu0 0.0
        %2065 = vmatpush1.msra.mxu0 0.0
        %2066 = vmatprep.subr.mxu0 0.0
        %2067 = vmatpush1.msra.mxu0 0.0
        %2068 = vmatprep.subr.mxu0 0.0
        %2069 = vmatpush1.msra.mxu0 0.0
        %2070 = vmatprep.subr.mxu0 0.0
        %2071 = vmatpush1.msra.mxu0 0.0
        %2072 = vmatprep.subr.mxu0 0.0
        %2073 = vmatpush1.msra.mxu0 0.0
        %2074 = vmatprep.subr.mxu0 0.0
        %2075 = vmatpush1.msra.mxu0 0.0
        %2076 = vmatprep.subr.mxu0 0.0
        %2077 = vmatpush1.msra.mxu0 0.0
        %2078 = vmatprep.subr.mxu0 0.0
        %2079 = vmatpush1.msra.mxu0 0.0
        %2080 = vmatprep.subr.mxu0 0.0
        %2081 = vmatpush1.msra.mxu0 %v2048
        %2082 = vmatprep.subr.mxu0 0.0
        %2083 = vmatpush1.msra.mxu0 %v2047
        %2084 = vmatprep.subr.mxu0 0.0
        %2085 = vmatpush2.msra.mxu0 0.0
        %2086 = vmatprep.subr.mxu0 0.0
        %2087 = vmatpush2.msra.mxu0 0.0
        %2088 = vmatprep.subr.mxu0 0.0
        %2089 = vmatpush2.msra.mxu0 0.0
        %2090 = vmatprep.subr.mxu0 0.0
        %2091 = vmatpush2.msra.mxu0 0.0
        %2092 = vmatprep.subr.mxu0 0.0
        %2093 = vmatpush2.msra.mxu0 0.0
        %2094 = vmatprep.subr.mxu0 0.0
        %2095 = vmatpush2.msra.mxu0 0.0
        %2096 = vmatprep.subr.mxu0 0.0
        %2097 = vmatpush2.msra.mxu0 0.0
        %2098 = vmatprep.subr.mxu0 0.0
        %2099 = vmatpush2.msra.mxu0 0.0
        %2100 = vmatprep.subr.mxu0 0.0
        %2101 = vmatpush2.msra.mxu0 0.0
        %2102 = vmatprep.subr.mxu0 0.0
        %2103 = vmatpush2.msra.mxu0 0.0
        %2104 = vmatprep.subr.mxu0 0.0
        %2105 = vmatpush2.msra.mxu0 0.0
        %2106 = vmatprep.subr.mxu0 0.0
        %2107 = vmatpush2.msra.mxu0 0.0
        %2108 = vmatprep.subr.mxu0 0.0
        %2109 = vmatpush2.msra.mxu0 0.0
        %2110 = vmatprep.subr.mxu0 0.0
        %2111 = vmatpush2.msra.mxu0 0.0
        %2112 = vmatprep.subr.mxu0 0.0
        %2113 = vmatpush2.msra.mxu0 0.0
        %2114 = vmatprep.subr.mxu0 0.0
        %2115 = vmatpush2.msra.mxu0 0.0
        %2116 = vmatprep.mubr.f32.mxu0 0.0
        %2117 = vmatmul.mubr.f32.gmra.mxu0 %v2050
        %v2118 = vpop.f32.mrf.mxu0
        %v2119 = vadd.f32 0.0, %v2118
        %v2120 = vpop.f32.mrf.mxu0
        %2121 = vdwg.mxu0
        %v2122 = vadd.f32 %v2045, %v2119
        %s2123 = scalar_lea.vmem %s6, 176
        %v2124 = vld [vmem:[%s2123] sm:$0xff]
        %v2125 = vld [vmem:[%s2123 + $0x8] sm:$0xff]
        %v2126 = vrot.slane %v1276, 6
        %v2127 = vsel %vm362, %v2126, 0
        %2129 = vmatprep.subr.mxu0 0.0
        %2130 = vmatpush1.msra.mxu0 0.0
        %2131 = vmatprep.subr.mxu0 0.0
        %2132 = vmatpush1.msra.mxu0 0.0
        %2133 = vmatprep.subr.mxu0 0.0
        %2134 = vmatpush1.msra.mxu0 0.0
        %2135 = vmatprep.subr.mxu0 0.0
        %2136 = vmatpush1.msra.mxu0 0.0
        %2137 = vmatprep.subr.mxu0 0.0
        %2138 = vmatpush1.msra.mxu0 0.0
        %2139 = vmatprep.subr.mxu0 0.0
        %2140 = vmatpush1.msra.mxu0 0.0
        %2141 = vmatprep.subr.mxu0 0.0
        %2142 = vmatpush1.msra.mxu0 0.0
        %2143 = vmatprep.subr.mxu0 0.0
        %2144 = vmatpush1.msra.mxu0 0.0
        %2145 = vmatprep.subr.mxu0 0.0
        %2146 = vmatpush1.msra.mxu0 0.0
        %2147 = vmatprep.subr.mxu0 0.0
        %2148 = vmatpush1.msra.mxu0 0.0
        %2149 = vmatprep.subr.mxu0 0.0
        %2150 = vmatpush1.msra.mxu0 0.0
        %2151 = vmatprep.subr.mxu0 0.0
        %2152 = vmatpush1.msra.mxu0 0.0
        %2153 = vmatprep.subr.mxu0 0.0
        %2154 = vmatpush1.msra.mxu0 0.0
        %2155 = vmatprep.subr.mxu0 0.0
        %2156 = vmatpush1.msra.mxu0 0.0
        %2157 = vmatprep.subr.mxu0 0.0
        %2158 = vmatpush1.msra.mxu0 %v2125
        %2159 = vmatprep.subr.mxu0 0.0
        %2160 = vmatpush1.msra.mxu0 %v2124
        %2161 = vmatprep.subr.mxu0 0.0
        %2162 = vmatpush2.msra.mxu0 0.0
        %2163 = vmatprep.subr.mxu0 0.0
        %2164 = vmatpush2.msra.mxu0 0.0
        %2165 = vmatprep.subr.mxu0 0.0
        %2166 = vmatpush2.msra.mxu0 0.0
        %2167 = vmatprep.subr.mxu0 0.0
        %2168 = vmatpush2.msra.mxu0 0.0
        %2169 = vmatprep.subr.mxu0 0.0
        %2170 = vmatpush2.msra.mxu0 0.0
        %2171 = vmatprep.subr.mxu0 0.0
        %2172 = vmatpush2.msra.mxu0 0.0
        %2173 = vmatprep.subr.mxu0 0.0
        %2174 = vmatpush2.msra.mxu0 0.0
        %2175 = vmatprep.subr.mxu0 0.0
        %2176 = vmatpush2.msra.mxu0 0.0
        %2177 = vmatprep.subr.mxu0 0.0
        %2178 = vmatpush2.msra.mxu0 0.0
        %2179 = vmatprep.subr.mxu0 0.0
        %2180 = vmatpush2.msra.mxu0 0.0
        %2181 = vmatprep.subr.mxu0 0.0
        %2182 = vmatpush2.msra.mxu0 0.0
        %2183 = vmatprep.subr.mxu0 0.0
        %2184 = vmatpush2.msra.mxu0 0.0
        %2185 = vmatprep.subr.mxu0 0.0
        %2186 = vmatpush2.msra.mxu0 0.0
        %2187 = vmatprep.subr.mxu0 0.0
        %2188 = vmatpush2.msra.mxu0 0.0
        %2189 = vmatprep.subr.mxu0 0.0
        %2190 = vmatpush2.msra.mxu0 0.0
        %2191 = vmatprep.subr.mxu0 0.0
        %2192 = vmatpush2.msra.mxu0 0.0
        %2193 = vmatprep.mubr.f32.mxu0 0.0
        %2194 = vmatmul.mubr.f32.gmra.mxu0 %v2127
        %v2195 = vpop.f32.mrf.mxu0
        %v2196 = vadd.f32 0.0, %v2195
        %v2197 = vpop.f32.mrf.mxu0
        %2198 = vdwg.mxu0
        %v2199 = vadd.f32 %v2122, %v2196
        %s2200 = scalar_lea.vmem %s6, 192
        %v2201 = vld [vmem:[%s2200] sm:$0xff]
        %v2202 = vld [vmem:[%s2200 + $0x8] sm:$0xff]
        %v2204 = vsel %vm362, %v1277, 0
        %2206 = vmatprep.subr.mxu0 0.0
        %2207 = vmatpush1.msra.mxu0 0.0
        %2208 = vmatprep.subr.mxu0 0.0
        %2209 = vmatpush1.msra.mxu0 0.0
        %2210 = vmatprep.subr.mxu0 0.0
        %2211 = vmatpush1.msra.mxu0 0.0
        %2212 = vmatprep.subr.mxu0 0.0
        %2213 = vmatpush1.msra.mxu0 0.0
        %2214 = vmatprep.subr.mxu0 0.0
        %2215 = vmatpush1.msra.mxu0 0.0
        %2216 = vmatprep.subr.mxu0 0.0
        %2217 = vmatpush1.msra.mxu0 0.0
        %2218 = vmatprep.subr.mxu0 0.0
        %2219 = vmatpush1.msra.mxu0 0.0
        %2220 = vmatprep.subr.mxu0 0.0
        %2221 = vmatpush1.msra.mxu0 0.0
        %2222 = vmatprep.subr.mxu0 0.0
        %2223 = vmatpush1.msra.mxu0 0.0
        %2224 = vmatprep.subr.mxu0 0.0
        %2225 = vmatpush1.msra.mxu0 0.0
        %2226 = vmatprep.subr.mxu0 0.0
        %2227 = vmatpush1.msra.mxu0 0.0
        %2228 = vmatprep.subr.mxu0 0.0
        %2229 = vmatpush1.msra.mxu0 0.0
        %2230 = vmatprep.subr.mxu0 0.0
        %2231 = vmatpush1.msra.mxu0 0.0
        %2232 = vmatprep.subr.mxu0 0.0
        %2233 = vmatpush1.msra.mxu0 0.0
        %2234 = vmatprep.subr.mxu0 0.0
        %2235 = vmatpush1.msra.mxu0 %v2202
        %2236 = vmatprep.subr.mxu0 0.0
        %2237 = vmatpush1.msra.mxu0 %v2201
        %2238 = vmatprep.subr.mxu0 0.0
        %2239 = vmatpush2.msra.mxu0 0.0
        %2240 = vmatprep.subr.mxu0 0.0
        %2241 = vmatpush2.msra.mxu0 0.0
        %2242 = vmatprep.subr.mxu0 0.0
        %2243 = vmatpush2.msra.mxu0 0.0
        %2244 = vmatprep.subr.mxu0 0.0
        %2245 = vmatpush2.msra.mxu0 0.0
        %2246 = vmatprep.subr.mxu0 0.0
        %2247 = vmatpush2.msra.mxu0 0.0
        %2248 = vmatprep.subr.mxu0 0.0
        %2249 = vmatpush2.msra.mxu0 0.0
        %2250 = vmatprep.subr.mxu0 0.0
        %2251 = vmatpush2.msra.mxu0 0.0
        %2252 = vmatprep.subr.mxu0 0.0
        %2253 = vmatpush2.msra.mxu0 0.0
        %2254 = vmatprep.subr.mxu0 0.0
        %2255 = vmatpush2.msra.mxu0 0.0
        %2256 = vmatprep.subr.mxu0 0.0
        %2257 = vmatpush2.msra.mxu0 0.0
        %2258 = vmatprep.subr.mxu0 0.0
        %2259 = vmatpush2.msra.mxu0 0.0
        %2260 = vmatprep.subr.mxu0 0.0
        %2261 = vmatpush2.msra.mxu0 0.0
        %2262 = vmatprep.subr.mxu0 0.0
        %2263 = vmatpush2.msra.mxu0 0.0
        %2264 = vmatprep.subr.mxu0 0.0
        %2265 = vmatpush2.msra.mxu0 0.0
        %2266 = vmatprep.subr.mxu0 0.0
        %2267 = vmatpush2.msra.mxu0 0.0
        %2268 = vmatprep.subr.mxu0 0.0
        %2269 = vmatpush2.msra.mxu0 0.0
        %2270 = vmatprep.mubr.f32.mxu0 0.0
        %2271 = vmatmul.mubr.f32.gmra.mxu0 %v2204
        %v2272 = vpop.f32.mrf.mxu0
        %v2273 = vadd.f32 0.0, %v2272
        %v2274 = vpop.f32.mrf.mxu0
        %2275 = vdwg.mxu0
        %v2276 = vadd.f32 %v2199, %v2273
        %s2277 = scalar_lea.vmem %s6, 208
        %v2278 = vld [vmem:[%s2277] sm:$0xff]
        %v2279 = vld [vmem:[%s2277 + $0x8] sm:$0xff]
        %v2280 = vrot.slane %v1277, 2
        %v2281 = vsel %vm362, %v2280, 0
        %2283 = vmatprep.subr.mxu0 0.0
        %2284 = vmatpush1.msra.mxu0 0.0
        %2285 = vmatprep.subr.mxu0 0.0
        %2286 = vmatpush1.msra.mxu0 0.0
        %2287 = vmatprep.subr.mxu0 0.0
        %2288 = vmatpush1.msra.mxu0 0.0
        %2289 = vmatprep.subr.mxu0 0.0
        %2290 = vmatpush1.msra.mxu0 0.0
        %2291 = vmatprep.subr.mxu0 0.0
        %2292 = vmatpush1.msra.mxu0 0.0
        %2293 = vmatprep.subr.mxu0 0.0
        %2294 = vmatpush1.msra.mxu0 0.0
        %2295 = vmatprep.subr.mxu0 0.0
        %2296 = vmatpush1.msra.mxu0 0.0
        %2297 = vmatprep.subr.mxu0 0.0
        %2298 = vmatpush1.msra.mxu0 0.0
        %2299 = vmatprep.subr.mxu0 0.0
        %2300 = vmatpush1.msra.mxu0 0.0
        %2301 = vmatprep.subr.mxu0 0.0
        %2302 = vmatpush1.msra.mxu0 0.0
        %2303 = vmatprep.subr.mxu0 0.0
        %2304 = vmatpush1.msra.mxu0 0.0
        %2305 = vmatprep.subr.mxu0 0.0
        %2306 = vmatpush1.msra.mxu0 0.0
        %2307 = vmatprep.subr.mxu0 0.0
        %2308 = vmatpush1.msra.mxu0 0.0
        %2309 = vmatprep.subr.mxu0 0.0
        %2310 = vmatpush1.msra.mxu0 0.0
        %2311 = vmatprep.subr.mxu0 0.0
        %2312 = vmatpush1.msra.mxu0 %v2279
        %2313 = vmatprep.subr.mxu0 0.0
        %2314 = vmatpush1.msra.mxu0 %v2278
        %2315 = vmatprep.subr.mxu0 0.0
        %2316 = vmatpush2.msra.mxu0 0.0
        %2317 = vmatprep.subr.mxu0 0.0
        %2318 = vmatpush2.msra.mxu0 0.0
        %2319 = vmatprep.subr.mxu0 0.0
        %2320 = vmatpush2.msra.mxu0 0.0
        %2321 = vmatprep.subr.mxu0 0.0
        %2322 = vmatpush2.msra.mxu0 0.0
        %2323 = vmatprep.subr.mxu0 0.0
        %2324 = vmatpush2.msra.mxu0 0.0
        %2325 = vmatprep.subr.mxu0 0.0
        %2326 = vmatpush2.msra.mxu0 0.0
        %2327 = vmatprep.subr.mxu0 0.0
        %2328 = vmatpush2.msra.mxu0 0.0
        %2329 = vmatprep.subr.mxu0 0.0
        %2330 = vmatpush2.msra.mxu0 0.0
        %2331 = vmatprep.subr.mxu0 0.0
        %2332 = vmatpush2.msra.mxu0 0.0
        %2333 = vmatprep.subr.mxu0 0.0
        %2334 = vmatpush2.msra.mxu0 0.0
        %2335 = vmatprep.subr.mxu0 0.0
        %2336 = vmatpush2.msra.mxu0 0.0
        %2337 = vmatprep.subr.mxu0 0.0
        %2338 = vmatpush2.msra.mxu0 0.0
        %2339 = vmatprep.subr.mxu0 0.0
        %2340 = vmatpush2.msra.mxu0 0.0
        %2341 = vmatprep.subr.mxu0 0.0
        %2342 = vmatpush2.msra.mxu0 0.0
        %2343 = vmatprep.subr.mxu0 0.0
        %2344 = vmatpush2.msra.mxu0 0.0
        %2345 = vmatprep.subr.mxu0 0.0
        %2346 = vmatpush2.msra.mxu0 0.0
        %2347 = vmatprep.mubr.f32.mxu0 0.0
        %2348 = vmatmul.mubr.f32.gmra.mxu0 %v2281
        %v2349 = vpop.f32.mrf.mxu0
        %v2350 = vadd.f32 0.0, %v2349
        %v2351 = vpop.f32.mrf.mxu0
        %2352 = vdwg.mxu0
        %v2353 = vadd.f32 %v2276, %v2350
        %s2354 = scalar_lea.vmem %s6, 224
        %v2355 = vld [vmem:[%s2354] sm:$0xff]
        %v2356 = vld [vmem:[%s2354 + $0x8] sm:$0xff]
        %v2357 = vrot.slane %v1277, 4
        %v2358 = vsel %vm362, %v2357, 0
        %2360 = vmatprep.subr.mxu0 0.0
        %2361 = vmatpush1.msra.mxu0 0.0
        %2362 = vmatprep.subr.mxu0 0.0
        %2363 = vmatpush1.msra.mxu0 0.0
        %2364 = vmatprep.subr.mxu0 0.0
        %2365 = vmatpush1.msra.mxu0 0.0
        %2366 = vmatprep.subr.mxu0 0.0
        %2367 = vmatpush1.msra.mxu0 0.0
        %2368 = vmatprep.subr.mxu0 0.0
        %2369 = vmatpush1.msra.mxu0 0.0
        %2370 = vmatprep.subr.mxu0 0.0
        %2371 = vmatpush1.msra.mxu0 0.0
        %2372 = vmatprep.subr.mxu0 0.0
        %2373 = vmatpush1.msra.mxu0 0.0
        %2374 = vmatprep.subr.mxu0 0.0
        %2375 = vmatpush1.msra.mxu0 0.0
        %2376 = vmatprep.subr.mxu0 0.0
        %2377 = vmatpush1.msra.mxu0 0.0
        %2378 = vmatprep.subr.mxu0 0.0
        %2379 = vmatpush1.msra.mxu0 0.0
        %2380 = vmatprep.subr.mxu0 0.0
        %2381 = vmatpush1.msra.mxu0 0.0
        %2382 = vmatprep.subr.mxu0 0.0
        %2383 = vmatpush1.msra.mxu0 0.0
        %2384 = vmatprep.subr.mxu0 0.0
        %2385 = vmatpush1.msra.mxu0 0.0
        %2386 = vmatprep.subr.mxu0 0.0
        %2387 = vmatpush1.msra.mxu0 0.0
        %2388 = vmatprep.subr.mxu0 0.0
        %2389 = vmatpush1.msra.mxu0 %v2356
        %2390 = vmatprep.subr.mxu0 0.0
        %2391 = vmatpush1.msra.mxu0 %v2355
        %2392 = vmatprep.subr.mxu0 0.0
        %2393 = vmatpush2.msra.mxu0 0.0
        %2394 = vmatprep.subr.mxu0 0.0
        %2395 = vmatpush2.msra.mxu0 0.0
        %2396 = vmatprep.subr.mxu0 0.0
        %2397 = vmatpush2.msra.mxu0 0.0
        %2398 = vmatprep.subr.mxu0 0.0
        %2399 = vmatpush2.msra.mxu0 0.0
        %2400 = vmatprep.subr.mxu0 0.0
        %2401 = vmatpush2.msra.mxu0 0.0
        %2402 = vmatprep.subr.mxu0 0.0
        %2403 = vmatpush2.msra.mxu0 0.0
        %2404 = vmatprep.subr.mxu0 0.0
        %2405 = vmatpush2.msra.mxu0 0.0
        %2406 = vmatprep.subr.mxu0 0.0
        %2407 = vmatpush2.msra.mxu0 0.0
        %2408 = vmatprep.subr.mxu0 0.0
        %2409 = vmatpush2.msra.mxu0 0.0
        %2410 = vmatprep.subr.mxu0 0.0
        %2411 = vmatpush2.msra.mxu0 0.0
        %2412 = vmatprep.subr.mxu0 0.0
        %2413 = vmatpush2.msra.mxu0 0.0
        %2414 = vmatprep.subr.mxu0 0.0
        %2415 = vmatpush2.msra.mxu0 0.0
        %2416 = vmatprep.subr.mxu0 0.0
        %2417 = vmatpush2.msra.mxu0 0.0
        %2418 = vmatprep.subr.mxu0 0.0
        %2419 = vmatpush2.msra.mxu0 0.0
        %2420 = vmatprep.subr.mxu0 0.0
        %2421 = vmatpush2.msra.mxu0 0.0
        %2422 = vmatprep.subr.mxu0 0.0
        %2423 = vmatpush2.msra.mxu0 0.0
        %2424 = vmatprep.mubr.f32.mxu0 0.0
        %2425 = vmatmul.mubr.f32.gmra.mxu0 %v2358
        %v2426 = vpop.f32.mrf.mxu0
        %v2427 = vadd.f32 0.0, %v2426
        %v2428 = vpop.f32.mrf.mxu0
        %2429 = vdwg.mxu0
        %v2430 = vadd.f32 %v2353, %v2427
        %s2431 = scalar_lea.vmem %s6, 240
        %v2432 = vld [vmem:[%s2431] sm:$0xff]
        %v2433 = vld [vmem:[%s2431 + $0x8] sm:$0xff]
        %v2434 = vrot.slane %v1277, 6
        %v2435 = vsel %vm362, %v2434, 0
        %2437 = vmatprep.subr.mxu0 0.0
        %2438 = vmatpush1.msra.mxu0 0.0
        %2439 = vmatprep.subr.mxu0 0.0
        %2440 = vmatpush1.msra.mxu0 0.0
        %2441 = vmatprep.subr.mxu0 0.0
        %2442 = vmatpush1.msra.mxu0 0.0
        %2443 = vmatprep.subr.mxu0 0.0
        %2444 = vmatpush1.msra.mxu0 0.0
        %2445 = vmatprep.subr.mxu0 0.0
        %2446 = vmatpush1.msra.mxu0 0.0
        %2447 = vmatprep.subr.mxu0 0.0
        %2448 = vmatpush1.msra.mxu0 0.0
        %2449 = vmatprep.subr.mxu0 0.0
        %2450 = vmatpush1.msra.mxu0 0.0
        %2451 = vmatprep.subr.mxu0 0.0
        %2452 = vmatpush1.msra.mxu0 0.0
        %2453 = vmatprep.subr.mxu0 0.0
        %2454 = vmatpush1.msra.mxu0 0.0
        %2455 = vmatprep.subr.mxu0 0.0
        %2456 = vmatpush1.msra.mxu0 0.0
        %2457 = vmatprep.subr.mxu0 0.0
        %2458 = vmatpush1.msra.mxu0 0.0
        %2459 = vmatprep.subr.mxu0 0.0
        %2460 = vmatpush1.msra.mxu0 0.0
        %2461 = vmatprep.subr.mxu0 0.0
        %2462 = vmatpush1.msra.mxu0 0.0
        %2463 = vmatprep.subr.mxu0 0.0
        %2464 = vmatpush1.msra.mxu0 0.0
        %2465 = vmatprep.subr.mxu0 0.0
        %2466 = vmatpush1.msra.mxu0 %v2433
        %2467 = vmatprep.subr.mxu0 0.0
        %2468 = vmatpush1.msra.mxu0 %v2432
        %2469 = vmatprep.subr.mxu0 0.0
        %2470 = vmatpush2.msra.mxu0 0.0
        %2471 = vmatprep.subr.mxu0 0.0
        %2472 = vmatpush2.msra.mxu0 0.0
        %2473 = vmatprep.subr.mxu0 0.0
        %2474 = vmatpush2.msra.mxu0 0.0
        %2475 = vmatprep.subr.mxu0 0.0
        %2476 = vmatpush2.msra.mxu0 0.0
        %2477 = vmatprep.subr.mxu0 0.0
        %2478 = vmatpush2.msra.mxu0 0.0
        %2479 = vmatprep.subr.mxu0 0.0
        %2480 = vmatpush2.msra.mxu0 0.0
        %2481 = vmatprep.subr.mxu0 0.0
        %2482 = vmatpush2.msra.mxu0 0.0
        %2483 = vmatprep.subr.mxu0 0.0
        %2484 = vmatpush2.msra.mxu0 0.0
        %2485 = vmatprep.subr.mxu0 0.0
        %2486 = vmatpush2.msra.mxu0 0.0
        %2487 = vmatprep.subr.mxu0 0.0
        %2488 = vmatpush2.msra.mxu0 0.0
        %2489 = vmatprep.subr.mxu0 0.0
        %2490 = vmatpush2.msra.mxu0 0.0
        %2491 = vmatprep.subr.mxu0 0.0
        %2492 = vmatpush2.msra.mxu0 0.0
        %2493 = vmatprep.subr.mxu0 0.0
        %2494 = vmatpush2.msra.mxu0 0.0
        %2495 = vmatprep.subr.mxu0 0.0
        %2496 = vmatpush2.msra.mxu0 0.0
        %2497 = vmatprep.subr.mxu0 0.0
        %2498 = vmatpush2.msra.mxu0 0.0
        %2499 = vmatprep.subr.mxu0 0.0
        %2500 = vmatpush2.msra.mxu0 0.0
        %2501 = vmatprep.mubr.f32.mxu0 0.0
        %2502 = vmatmul.mubr.f32.gmra.mxu0 %v2435
        %v2503 = vpop.f32.mrf.mxu0
        %v2504 = vadd.f32 0.0, %v2503
        %v2505 = vpop.f32.mrf.mxu0
        %2506 = vdwg.mxu0
        %v2507 = vadd.f32 %v2430, %v2504
        %v2509 = vlaneseq
        %v2510 = vshrl.u32 %v2509, 7
        %v2511 = vsub.s32 0, %v2510
        %v2512 = vrot.slane %v1278, %v2511
        %v2514 = vadd.f32 %v2507, %v2512
        %v2515 = vmax.f32 %v2514, 0.0
        %v2516 = vld [vmem:[%s8] sm:$0xff]
        %v2517 = vld [vmem:[%s8 + $0x8] sm:$0xff]
        %v2518 = vld [vmem:[%s8 + $0x10] sm:$0xff]
        %v2519 = vld [vmem:[%s8 + $0x18] sm:$0xff]
        %v2520 = vld [vmem:[%s9] sm:$0x1]
        %v2522 = vlaneseq
        %v2523 = vshrl.u32 %v2522, 7
        %v2524 = vsub.s32 0, %v2523
        %v2525 = vrot.slane %v2520, %v2524
        %vm2527 = vcmask 261120
        %v2529 = vsel %vm2527, %v2515, 0
        %2531 = vmatprep.subr.mxu0 0.0
        %2532 = vmatpush1.msra.mxu0 0.0
        %2533 = vmatprep.subr.mxu0 0.0
        %2534 = vmatpush1.msra.mxu0 0.0
        %2535 = vmatprep.subr.mxu0 0.0
        %2536 = vmatpush1.msra.mxu0 0.0
        %2537 = vmatprep.subr.mxu0 0.0
        %2538 = vmatpush1.msra.mxu0 0.0
        %2539 = vmatprep.subr.mxu0 0.0
        %2540 = vmatpush1.msra.mxu0 0.0
        %2541 = vmatprep.subr.mxu0 0.0
        %2542 = vmatpush1.msra.mxu0 0.0
        %2543 = vmatprep.subr.mxu0 0.0
        %2544 = vmatpush1.msra.mxu0 0.0
        %2545 = vmatprep.subr.mxu0 0.0
        %2546 = vmatpush1.msra.mxu0 0.0
        %2547 = vmatprep.subr.mxu0 0.0
        %2548 = vmatpush1.msra.mxu0 0.0
        %2549 = vmatprep.subr.mxu0 0.0
        %2550 = vmatpush1.msra.mxu0 0.0
        %2551 = vmatprep.subr.mxu0 0.0
        %2552 = vmatpush1.msra.mxu0 0.0
        %2553 = vmatprep.subr.mxu0 0.0
        %2554 = vmatpush1.msra.mxu0 0.0
        %2555 = vmatprep.subr.mxu0 0.0
        %2556 = vmatpush1.msra.mxu0 %v2519
        %2557 = vmatprep.subr.mxu0 0.0
        %2558 = vmatpush1.msra.mxu0 %v2518
        %2559 = vmatprep.subr.mxu0 0.0
        %2560 = vmatpush1.msra.mxu0 %v2517
        %2561 = vmatprep.subr.mxu0 0.0
        %2562 = vmatpush1.msra.mxu0 %v2516
        %2563 = vmatprep.subr.mxu0 0.0
        %2564 = vmatpush2.msra.mxu0 0.0
        %2565 = vmatprep.subr.mxu0 0.0
        %2566 = vmatpush2.msra.mxu0 0.0
        %2567 = vmatprep.subr.mxu0 0.0
        %2568 = vmatpush2.msra.mxu0 0.0
        %2569 = vmatprep.subr.mxu0 0.0
        %2570 = vmatpush2.msra.mxu0 0.0
        %2571 = vmatprep.subr.mxu0 0.0
        %2572 = vmatpush2.msra.mxu0 0.0
        %2573 = vmatprep.subr.mxu0 0.0
        %2574 = vmatpush2.msra.mxu0 0.0
        %2575 = vmatprep.subr.mxu0 0.0
        %2576 = vmatpush2.msra.mxu0 0.0
        %2577 = vmatprep.subr.mxu0 0.0
        %2578 = vmatpush2.msra.mxu0 0.0
        %2579 = vmatprep.subr.mxu0 0.0
        %2580 = vmatpush2.msra.mxu0 0.0
        %2581 = vmatprep.subr.mxu0 0.0
        %2582 = vmatpush2.msra.mxu0 0.0
        %2583 = vmatprep.subr.mxu0 0.0
        %2584 = vmatpush2.msra.mxu0 0.0
        %2585 = vmatprep.subr.mxu0 0.0
        %2586 = vmatpush2.msra.mxu0 0.0
        %2587 = vmatprep.subr.mxu0 0.0
        %2588 = vmatpush2.msra.mxu0 0.0
        %2589 = vmatprep.subr.mxu0 0.0
        %2590 = vmatpush2.msra.mxu0 0.0
        %2591 = vmatprep.subr.mxu0 0.0
        %2592 = vmatpush2.msra.mxu0 0.0
        %2593 = vmatprep.subr.mxu0 0.0
        %2594 = vmatpush2.msra.mxu0 0.0
        %2595 = vmatprep.mubr.f32.mxu0 0.0
        %2596 = vmatmul.mubr.f32.gmra.mxu0 %v2529
        %v2597 = vpop.f32.mrf.mxu0
        %v2598 = vadd.f32 %v2525, %v2597
        %v2599 = vpop.f32.mrf.mxu0
        %2600 = vdwg.mxu0
        %vm2601 = vcmask 58368
        %2602 = vst.msk [vmem:[%s350] sm:$0x3] %vm2601, %v2598
        %s2603 = sand.u32 %s247, 1
        %s2604 = scalar_lea.sflag [#allocation3], %s2603
        %s2605 = sand.u32 %s247, 1
        %s2606 = smul.addr %s2605, 2
        %s2607 = scalar_lea.vmem [#allocation2], %s2606
        // Predicated region
        $region61: #{selection_gnn_forward.1} parent=59 // pred_check
          %p2608 = pneg %p257
        $region62: #{selection_gnn_forward.1} parent=59 // pred_check_branch
          %2610 = sbr.rel (%p2608) target = $region64
        $region63: #{selection_gnn_forward.1} parent=59 // pred_region
          %s2612 = ssub.s32 32, 32
          %2613 = vsyncadd %s2604, %s2612
          %s2614 = smul.addr %s24, 32
          %s2615 = scalar_lea.hbm %s10, %s2614
          %s2617 = sshll.u32 %s2607, 4
          %s2618 = int_to_ptr.vmem [resolvable:$true] %s2617
          %2620 = dma.vmem_to_hbm [thread:$0]  %s2618, 32, %s2615, %s2604
        $region64: #{selection_gnn_forward.1} parent=59 // pred_fallthru
          _
      $region60: #{selection_gnn_forward.1} parent=5 // pred_fallthru
        _
      %p2621 = scmp.le.s32.totalorder 2, %s19
      // Predicated region
      $region65: #{selection_gnn_forward.1} parent=5 // pred_check
        %p2622 = pneg %p2621
      $region66: #{selection_gnn_forward.1} parent=5 // pred_check_branch
        %2624 = sbr.rel (%p2622) target = $region68
      $region67: #{selection_gnn_forward.1} parent=5 // pred_region
        %s2625 = ssub.s32 %s19, 2
        // Predicated region
        $region69: #{selection_gnn_forward.1} parent=67 // pred_check
          %p2626 = pneg %p263
        $region70: #{selection_gnn_forward.1} parent=67 // pred_check_branch
          %2628 = sbr.rel (%p2626) target = $region72
        $region71: #{selection_gnn_forward.1} parent=67 // pred_region
          %s2629 = sand.u32 %s248, 1
          %s2630 = scalar_lea.sflag [#allocation3], %s2629
          %s2631 = sand.u32 %s248, 1
          %s2632 = smul.addr %s2631, 2
          %s2633 = scalar_lea.vmem [#allocation2], %s2632
          %2634 = dma.done %s2630, 32
        $region72: #{selection_gnn_forward.1} parent=67 // pred_fallthru
          _
      $region68: #{selection_gnn_forward.1} parent=5 // pred_fallthru
        _
    $region6: #{selection_gnn_forward.1} parent=1 // loop_footer
      %s23 = sadd.s32 1, %s19
    $region7: #{selection_gnn_forward.1} parent=1 // loop_footer_branch
      %18 = sbr.rel target = $region3
    $region8: #{selection_gnn_forward.1} parent=1 // loop_exit
      _
    %2635 = vsyncpa [#allocation3], 1
    %s2636 = scalar_lea.sflag [#allocation3], 1
    %2637 = vsyncpa %s2636, 1

</llo_original>
